<compile_context>
chip_gen: v5e
topology: v5e:2x2
jax: 0.10.0
libtpu: 0.0.40
codegen_flags: <defaults>
</compile_context>

<pallas_src>
import functools

import jax
import jax.numpy as jnp
from jax.experimental import pallas as pl
from jax.experimental.pallas import tpu as pltpu

NEG_SLOPE = 0.1  # LeakyReLU slope used everywhere in the module


def _leaky(x):
    return jnp.where(x >= 0, x, NEG_SLOPE * x)


def _round_up(x, m):
    return ((x + m - 1) // m) * m


def _chip_defaults():
    """(default time tile, vmem_limit_bytes) tuned per TPU generation."""
    try:
        kind = jax.devices()[0].device_kind.lower()
    except Exception:
        kind = ""
    if "v7" in kind:
        return 512, 44 * 1024 * 1024          # 64 MiB physical VMEM per TC
    if "v6" in kind or "v5 lite" in kind or "v5e" in kind:
        return 1024, 64 * 1024 * 1024         # 128 MiB physical VMEM
    return 512, 32 * 1024 * 1024              # safe default


def _vmem_bytes(layers_cfg, cin0, cmax, pad_max, tile_t):
    """Rough per-step VMEM footprint estimate (used to auto-shrink the tile)."""
    n = 0
    for lc in layers_cfg:
        K, cin, cout, halo = lc["K"], lc["cin"], lc["cout"], lc["halo"]
        w = (K * cin * cout + K * cout * cout) * 2 + 2 * cout * 4
        if lc["has_ds"]:
            w += cin * cout * 2 + cout * 4
        n += 2 * w                                  # weight blocks (2 buffers)
        n += (halo + tile_t) * cin * 4              # carried window scratch (f32)
    n += (tile_t + pad_max) * cmax * 4              # h1 scratch (f32)
    n += 2 * (tile_t * cin0 * 4 + tile_t * 4)       # x / probs blocks (2 buffers)
    n += 8 * tile_t * cmax * 4                      # headroom for live f32 tiles
    return n


def _dilated_conv(src_ref, rows, K, d, cin, w_ref, b_ref):
    """Causal dilated conv over the window held in `src_ref`.

    Output row r = sum_k src[r + k*d, :cin] @ W[k] + b, with W pre-flattened to
    (K*cin, cout).  Weights are bf16; activations are cast to bf16 at the MXU
    operand; accumulation stays f32."""
    wdt = w_ref.dtype
    if K > 1 and cin % 128 == 0:
        # im2col: one lane-aligned concat + a single K*cin-deep MXU matmul.
        mat = jnp.concatenate(
            [src_ref[k * d:k * d + rows, 0:cin] for k in range(K)], axis=1)
        acc = jnp.dot(mat.astype(wdt), w_ref[...],
                      preferred_element_type=jnp.float32)
    else:
        # per-tap accumulation: for sub-128 channel widths a lane-offset concat
        # costs more relayout than it saves (contraction is tiny either way).
        acc = jnp.dot(src_ref[0:rows, 0:cin].astype(wdt), w_ref[0:cin, :],
                      preferred_element_type=jnp.float32)
        for k in range(1, K):
            acc = acc + jnp.dot(src_ref[k * d:k * d + rows, 0:cin].astype(wdt),
                                w_ref[k * cin:(k + 1) * cin, :],
                                preferred_element_type=jnp.float32)
    return acc + b_ref[...]


# ----------------------------------------------------------------------------
# One kernel for the whole network:
#   inputs : x tile, then per layer (w1, b1, w2, b2[, wds, bds]), head_w, head_b
#   output : sigmoid probabilities, block (1, tile_t, 1)
#   scratch: per-layer causal window (halo+tile_t, Cin) f32  (carried over t),
#            shared h1 staging buffer (tile_t + pad_max, C) f32
# ----------------------------------------------------------------------------
def _fused_tcn_kernel(*refs, layers_cfg, tile_t):
    n_layers = len(layers_cfg)
    n_in = 1 + sum(6 if lc["has_ds"] else 4 for lc in layers_cfg) + 2
    in_refs, o_ref, scratch = refs[:n_in], refs[n_in], refs[n_in + 1:]
    win_refs, h1_ref = scratch[:n_layers], scratch[n_layers]

    it = iter(in_refs)
    x_ref = next(it)
    layer_refs = []
    for lc in layers_cfg:
        lr = {"w1": next(it), "b1": next(it), "w2": next(it), "b2": next(it)}
        if lc["has_ds"]:
            lr["wds"] = next(it)
            lr["bds"] = next(it)
        layer_refs.append(lr)
    hw_ref = next(it)
    hb_ref = next(it)

    t = pl.program_id(1)
    cur = x_ref[0]                                   # (tile_t, Cin0) f32

    for lc, lr, win in zip(layers_cfg, layer_refs, win_refs):
        K, d, pad, halo = lc["K"], lc["d"], lc["pad"], lc["halo"]
        cin, cout = lc["cin"], lc["cout"]
        n1 = tile_t + pad

        # --- causal left context, carried in VMEM between time tiles --------
        if halo > 0:
            @pl.when(t == 0)
            def _(win=win, halo=halo, cin=cin):       # sequence start: zero pad
                win[0:halo, :] = jnp.zeros((halo, cin), jnp.float32)

            @pl.when(t > 0)
            def _(win=win, halo=halo):                # last `halo` rows so far
                win[0:halo, :] = win[tile_t:tile_t + halo, :]
        win[halo:halo + tile_t, :] = cur              # this tile's layer input

        # --- conv1 + LeakyReLU; h1 staged in VMEM, never leaves the chip ----
        h1 = _leaky(_dilated_conv(win, n1, K, d, cin, lr["w1"], lr["b1"]))
        h1_ref[0:n1, 0:cout] = h1
        if pad > 0:
            @pl.when(t == 0)
            def _(pad=pad, cout=cout):                # causal zero-pad of h1
                h1_ref[0:pad, 0:cout] = jnp.zeros((pad, cout), jnp.float32)

        # --- conv2 + LeakyReLU ----------------------------------------------
        h2 = _leaky(_dilated_conv(h1_ref, tile_t, K, d, cout,
                                  lr["w2"], lr["b2"]))

        # --- residual (1x1 downsample when Cin != Cout) + final LeakyReLU ---
        if lc["has_ds"]:
            res = jnp.dot(cur.astype(lr["wds"].dtype), lr["wds"][...],
                          preferred_element_type=jnp.float32) + lr["bds"][...]
        else:
            res = cur
        cur = _leaky(h2 + res)

    # --- fused head: Linear(n_channel, 1) + sigmoid --------------------------
    z = jnp.dot(cur.astype(hw_ref.dtype), hw_ref[...],
                preferred_element_type=jnp.float32) + hb_ref[...]
    o_ref[0] = jax.nn.sigmoid(z).astype(o_ref.dtype)


# ----------------------------------------------------------------------------
# Forward pass of CausalConvDiscriminator
# ----------------------------------------------------------------------------
def causal_conv_discriminator(x, params, lin, channel_last=True, time_tile=None):
    """x: (B, T, input_size) if channel_last else (B, input_size, T).
    Returns sigmoid probabilities, shape (B, T, 1)."""
    if not channel_last:
        x = jnp.transpose(x, (0, 2, 1))               # -> (B, T, C) internal
    B, T, cin0 = x.shape

    layers_cfg = []
    for p in params:
        K, cin, cout = p["w1"].shape
        d = int(p["dilation"])
        pad = (K - 1) * d
        layers_cfg.append(dict(K=K, d=d, pad=pad, halo=2 * pad, cin=cin,
                               cout=cout, has_ds="w_ds" in p))
    layers_cfg = tuple(layers_cfg)
    pad_max = max(lc["pad"] for lc in layers_cfg)
    C = layers_cfg[-1]["cout"]
    c_h1 = max(lc["cout"] for lc in layers_cfg)
    cmax = max([cin0] + [lc["cout"] for lc in layers_cfg])

    tile_default, vmem_limit = _chip_defaults()
    if time_tile is None:
        tile_t = min(tile_default, max(128, _round_up(T, 128)))
        while (tile_t > 64 and
               _vmem_bytes(layers_cfg, cin0, cmax, pad_max, tile_t)
               > int(0.7 * vmem_limit)):
            tile_t //= 2
    else:
        tile_t = int(time_tile)
    assert tile_t % 8 == 0 and tile_t >= 8
    # TODO(synk): if the bf16 weights alone overflow the VMEM limit (very wide
    # or very deep TCNs) this single fused kernel needs a per-layer fallback.

    Tp = _round_up(T, tile_t)
    nT = Tp // tile_t
    if Tp != T:                                       # single end-pad of raw x
        x = jnp.pad(x, ((0, 0), (0, Tp - T), (0, 0)))
    x = x.astype(jnp.float32)

    def _const_spec(shape):
        nd = len(shape)
        return pl.BlockSpec(shape, lambda b, t: (0,) * nd)

    args = [x]
    in_specs = [pl.BlockSpec((1, tile_t, cin0), lambda b, t: (b, t, 0))]
    for p, lc in zip(params, layers_cfg):
        K, cin, cout = lc["K"], lc["cin"], lc["cout"]
        args += [
            p["w1"].reshape(K * cin, cout).astype(jnp.bfloat16),
            p["b1"].reshape(1, cout).astype(jnp.float32),
            p["w2"].reshape(K * cout, cout).astype(jnp.bfloat16),
            p["b2"].reshape(1, cout).astype(jnp.float32),
        ]
        in_specs += [_const_spec((K * cin, cout)), _const_spec((1, cout)),
                     _const_spec((K * cout, cout)), _const_spec((1, cout))]
        if lc["has_ds"]:
            args += [p["w_ds"].astype(jnp.bfloat16),
                     p["b_ds"].reshape(1, cout).astype(jnp.float32)]
            in_specs += [_const_spec((cin, cout)), _const_spec((1, cout))]
    args += [lin["w"].reshape(C, 1).astype(jnp.bfloat16),
             lin["b"].reshape(1, 1).astype(jnp.float32)]
    in_specs += [_const_spec((C, 1)), _const_spec((1, 1))]

    scratch_shapes = [pltpu.VMEM((lc["halo"] + tile_t, lc["cin"]), jnp.float32)
                      for lc in layers_cfg]
    scratch_shapes.append(pltpu.VMEM((tile_t + pad_max, c_h1), jnp.float32))

    kernel = functools.partial(_fused_tcn_kernel, layers_cfg=layers_cfg,
                               tile_t=tile_t)
    grid_spec = pltpu.PrefetchScalarGridSpec(
        num_scalar_prefetch=0,
        grid=(B, nT),
        in_specs=in_specs,
        out_specs=pl.BlockSpec((1, tile_t, 1), lambda b, t: (b, t, 0)),
        scratch_shapes=scratch_shapes,
    )
    probs = pl.pallas_call(
        kernel,
        out_shape=jax.ShapeDtypeStruct((B, Tp, 1), jnp.float32),
        grid_spec=grid_spec,
        compiler_params=pltpu.CompilerParams(
            dimension_semantics=("parallel", "arbitrary"),
            vmem_limit_bytes=vmem_limit,
        ),
    )(*args)
    return probs[:, :T, :]                            # (B, T, 1)


# ----------------------------------------------------------------------------
# Parameter initialization (deterministic, synthetic)
# ----------------------------------------------------------------------------
def init_params(key, input_size, n_layers, n_channel, kernel_size):
    params = []
    for i in range(n_layers):
        cin = input_size if i == 0 else n_channel
        cout = n_channel
        key, k1, k2, k3, k4, k5, k6 = jax.random.split(key, 7)
        s1 = 1.0 / jnp.sqrt(cin * kernel_size)
        s2 = 1.0 / jnp.sqrt(cout * kernel_size)
        layer = {
            "w1": jax.random.normal(k1, (kernel_size, cin, cout), jnp.float32) * s1,
            "b1": jax.random.normal(k2, (cout,), jnp.float32) * s1,
            "w2": jax.random.normal(k3, (kernel_size, cout, cout), jnp.float32) * s2,
            "b2": jax.random.normal(k4, (cout,), jnp.float32) * s2,
            "dilation": 2 ** i,
        }
        if cin != cout:  # 1x1 downsample conv on the residual path
            sd = 1.0 / jnp.sqrt(cin)
            layer["w_ds"] = jax.random.normal(k5, (cin, cout), jnp.float32) * sd
            layer["b_ds"] = jax.random.normal(k6, (cout,), jnp.float32) * sd
        params.append(layer)
    key, k1, k2 = jax.random.split(key, 3)
    sl = 1.0 / jnp.sqrt(n_channel)
    lin = {"w": jax.random.normal(k1, (n_channel,), jnp.float32) * sl,
           "b": jax.random.normal(k2, (1,), jnp.float32) * sl}
    return params, lin


# ----------------------------------------------------------------------------
# Pure-JAX reference (same math, f32, no Pallas) for on-device verification
# ----------------------------------------------------------------------------
def _reference(x, params, lin):
    h = x
    for layer in params:
        K = layer["w1"].shape[0]
        d = int(layer["dilation"])
        pad = (K - 1) * d
        T = h.shape[1]

        def conv(inp, w, b):
            xp = jnp.pad(inp, ((0, 0), (pad, 0), (0, 0)))
            out = b
            for k in range(K):
                out = out + jnp.einsum("btc,cd->btd", xp[:, k * d:k * d + T, :],
                                       w[k], precision=jax.lax.Precision.HIGHEST)
            return out

        h1 = _leaky(conv(h, layer["w1"], layer["b1"]))
        h2 = _leaky(conv(h1, layer["w2"], layer["b2"]))
        if "w_ds" in layer:
            res = jnp.einsum("btc,cd->btd", h, layer["w_ds"],
                             precision=jax.lax.Precision.HIGHEST) + layer["b_ds"]
        else:
            res = h
        h = _leaky(h2 + res)
    z = jnp.einsum("btc,c->bt", h, lin["w"],
                   precision=jax.lax.Precision.HIGHEST) + lin["b"]
    return jax.nn.sigmoid(z)[..., None]


if __name__ == "__main__":
    # Config 1: module-like defaults (exercises the 1x1 downsample path, K=2).
    B, T = 2, 16
    input_size, n_layers, n_channel, kernel_size = 4, 2, 32, 2
    key = jax.random.PRNGKey(0)
    key, kx, kp = jax.random.split(key, 3)
    x = jax.random.normal(kx, (B, T, input_size), jnp.float32)
    params, lin = init_params(kp, input_size, n_layers, n_channel, kernel_size)

    y = jax.block_until_ready(
        causal_conv_discriminator(x, params, lin, channel_last=True))
    # Same config with a tiny time tile -> exercises the carried-halo path.
    y_tiled = jax.block_until_ready(
        causal_conv_discriminator(x, params, lin, channel_last=True, time_tile=8))
    ref = _reference(x, params, lin)

    assert y.shape == (B, T, 1), y.shape
    assert y_tiled.shape == (B, T, 1), y_tiled.shape
    assert bool(jnp.all((y >= 0.0) & (y <= 1.0)))
    assert bool(jnp.allclose(y, ref, atol=3e-2)), float(jnp.max(jnp.abs(y - ref)))
    assert bool(jnp.allclose(y_tiled, ref, atol=3e-2)), \
        float(jnp.max(jnp.abs(y_tiled - ref)))
    assert bool(jnp.allclose(y, y_tiled, atol=2e-3))

    # Config 2: K=3, 3 layers -> deepest halo (16) larger than the time tile (8).
    B2, T2 = 2, 40
    key, kx2, kp2 = jax.random.split(key, 3)
    x2 = jax.random.normal(kx2, (B2, T2, 4), jnp.float32)
    params2, lin2 = init_params(kp2, 4, 3, 16, 3)
    y2 = jax.block_until_ready(
        causal_conv_discriminator(x2, params2, lin2, channel_last=True, time_tile=8))
    ref2 = _reference(x2, params2, lin2)
    assert y2.shape == (B2, T2, 1), y2.shape
    assert bool(jnp.allclose(y2, ref2, atol=3e-2)), \
        float(jnp.max(jnp.abs(y2 - ref2)))

    print("KERNEL_OK")
</pallas_src>

<mosaic_0001>
module attributes {stable_mosaic.version = 11 : i64} {
  func.func @_fused_tcn_kernel(%arg0: i32, %arg1: i32, %arg2: memref<1x128x4xf32, #tpu.memory_space<vmem>>, %arg3: memref<8x32xbf16, #tpu.memory_space<vmem>>, %arg4: memref<1x32xf32, #tpu.memory_space<vmem>>, %arg5: memref<64x32xbf16, #tpu.memory_space<vmem>>, %arg6: memref<1x32xf32, #tpu.memory_space<vmem>>, %arg7: memref<4x32xbf16, #tpu.memory_space<vmem>>, %arg8: memref<1x32xf32, #tpu.memory_space<vmem>>, %arg9: memref<64x32xbf16, #tpu.memory_space<vmem>>, %arg10: memref<1x32xf32, #tpu.memory_space<vmem>>, %arg11: memref<64x32xbf16, #tpu.memory_space<vmem>>, %arg12: memref<1x32xf32, #tpu.memory_space<vmem>>, %arg13: memref<32x1xbf16, #tpu.memory_space<vmem>>, %arg14: memref<1x1xf32, #tpu.memory_space<vmem>>, %arg15: memref<1x128x1xf32, #tpu.memory_space<vmem>>, %arg16: memref<130x4xf32, #tpu.memory_space<vmem>>, %arg17: memref<132x32xf32, #tpu.memory_space<vmem>>, %arg18: memref<130x32xf32, #tpu.memory_space<vmem>>) attributes {dimension_semantics = [#tpu.dimension_semantics<parallel>, #tpu.dimension_semantics<arbitrary>], iteration_bounds = array<i64: 2, 1>, scalar_prefetch = 0 : i64, scratch_operands = 3 : i64, tpu.core_type = #tpu.core_type<tc>, window_params = [{transform_indices = @transform_0, window_bounds = array<i64: 1, 128, 4>}, {pipeline_mode = #tpu.pipeline_mode<synchronous>, transform_indices = @transform_1, window_bounds = array<i64: 8, 32>}, {pipeline_mode = #tpu.pipeline_mode<synchronous>, transform_indices = @transform_2, window_bounds = array<i64: 1, 32>}, {pipeline_mode = #tpu.pipeline_mode<synchronous>, transform_indices = @transform_3, window_bounds = array<i64: 64, 32>}, {pipeline_mode = #tpu.pipeline_mode<synchronous>, transform_indices = @transform_4, window_bounds = array<i64: 1, 32>}, {pipeline_mode = #tpu.pipeline_mode<synchronous>, transform_indices = @transform_5, window_bounds = array<i64: 4, 32>}, {pipeline_mode = #tpu.pipeline_mode<synchronous>, transform_indices = @transform_6, window_bounds = array<i64: 1, 32>}, {pipeline_mode = #tpu.pipeline_mode<synchronous>, transform_indices = @transform_7, window_bounds = array<i64: 64, 32>}, {pipeline_mode = #tpu.pipeline_mode<synchronous>, transform_indices = @transform_8, window_bounds = array<i64: 1, 32>}, {pipeline_mode = #tpu.pipeline_mode<synchronous>, transform_indices = @transform_9, window_bounds = array<i64: 64, 32>}, {pipeline_mode = #tpu.pipeline_mode<synchronous>, transform_indices = @transform_10, window_bounds = array<i64: 1, 32>}, {pipeline_mode = #tpu.pipeline_mode<synchronous>, transform_indices = @transform_11, window_bounds = array<i64: 32, 1>}, {pipeline_mode = #tpu.pipeline_mode<synchronous>, transform_indices = @transform_12, window_bounds = array<i64: 1, 1>}, {transform_indices = @transform_13, window_bounds = array<i64: 1, 128, 1>}]} {
    %c0 = arith.constant 0 : index
    %c0_0 = arith.constant 0 : index
    %c0_1 = arith.constant 0 : index
    %0 = vector.load %arg2[%c0, %c0_0, %c0_1] : memref<1x128x4xf32, #tpu.memory_space<vmem>>, vector<1x128x4xf32>
    %1 = vector.shape_cast %0 : vector<1x128x4xf32> to vector<128x4xf32>
    %c0_i32 = arith.constant 0 : i32
    %2 = arith.cmpi eq, %arg1, %c0_i32 : i32
    %3 = arith.extui %2 : i1 to i32
    %c0_i32_2 = arith.constant 0 : i32
    %4 = arith.cmpi ne, %3, %c0_i32_2 : i32
    scf.if %4 {
      %cst_90 = arith.constant 0.000000e+00 : f32
      %124 = vector.broadcast %cst_90 : f32 to vector<2x4xf32>
      %c0_91 = arith.constant 0 : index
      %c0_92 = arith.constant 0 : index
      %125 = vector.load %arg16[%c0_91, %c0_92] : memref<130x4xf32, #tpu.memory_space<vmem>>, vector<2x4xf32>
      tpu.vector_store %arg16[%c0_91, %c0_92], %124 {strides = array<i32>} : memref<130x4xf32, #tpu.memory_space<vmem>>, vector<2x4xf32>,
    } else {
    }
    %c0_i32_3 = arith.constant 0 : i32
    %5 = arith.cmpi sgt, %arg1, %c0_i32_3 : i32
    %6 = arith.extui %5 : i1 to i32
    %c0_i32_4 = arith.constant 0 : i32
    %7 = arith.cmpi ne, %6, %c0_i32_4 : i32
    scf.if %7 {
      %c128 = arith.constant 128 : index
      %c0_90 = arith.constant 0 : index
      %124 = vector.load %arg16[%c128, %c0_90] : memref<130x4xf32, #tpu.memory_space<vmem>>, vector<2x4xf32>
      %c0_91 = arith.constant 0 : index
      %c0_92 = arith.constant 0 : index
      %125 = vector.load %arg16[%c0_91, %c0_92] : memref<130x4xf32, #tpu.memory_space<vmem>>, vector<2x4xf32>
      tpu.vector_store %arg16[%c0_91, %c0_92], %124 {strides = array<i32>} : memref<130x4xf32, #tpu.memory_space<vmem>>, vector<2x4xf32>,
    } else {
    }
    %c2 = arith.constant 2 : index
    %c0_5 = arith.constant 0 : index
    %8 = vector.load %arg16[%c2, %c0_5] : memref<130x4xf32, #tpu.memory_space<vmem>>, vector<128x4xf32>
    tpu.vector_store %arg16[%c2, %c0_5], %1 {strides = array<i32>} : memref<130x4xf32, #tpu.memory_space<vmem>>, vector<128x4xf32>,
    %c0_6 = arith.constant 0 : index
    %c0_7 = arith.constant 0 : index
    %9 = vector.load %arg16[%c0_6, %c0_7] : memref<130x4xf32, #tpu.memory_space<vmem>>, vector<129x4xf32>
    %10 = arith.truncf %9 : vector<129x4xf32> to vector<129x4xbf16>
    %c0_8 = arith.constant 0 : index
    %c0_9 = arith.constant 0 : index
    %11 = vector.load %arg3[%c0_8, %c0_9] : memref<8x32xbf16, #tpu.memory_space<vmem>>, vector<4x32xbf16>
    %cst = arith.constant dense<0.000000e+00> : vector<129x32xf32>
    %12 = tpu.matmul %10, %11, %cst {dimension_numbers = #tpu.dot_dimension_numbers<[1], [0], [0], [1], [0, 0, 1, 1], [], []>} : vector<129x4xbf16>, vector<4x32xbf16>, vector<129x32xf32> -> vector<129x32xf32>
    %c1 = arith.constant 1 : index
    %c0_10 = arith.constant 0 : index
    %13 = vector.load %arg16[%c1, %c0_10] : memref<130x4xf32, #tpu.memory_space<vmem>>, vector<129x4xf32>
    %14 = arith.truncf %13 : vector<129x4xf32> to vector<129x4xbf16>
    %c4 = arith.constant 4 : index
    %c0_11 = arith.constant 0 : index
    %15 = vector.load %arg3[%c4, %c0_11] : memref<8x32xbf16, #tpu.memory_space<vmem>>, vector<4x32xbf16>
    %cst_12 = arith.constant dense<0.000000e+00> : vector<129x32xf32>
    %16 = tpu.matmul %14, %15, %cst_12 {dimension_numbers = #tpu.dot_dimension_numbers<[1], [0], [0], [1], [0, 0, 1, 1], [], []>} : vector<129x4xbf16>, vector<4x32xbf16>, vector<129x32xf32> -> vector<129x32xf32>
    %17 = arith.addf %12, %16 : vector<129x32xf32>
    %c0_13 = arith.constant 0 : index
    %c0_14 = arith.constant 0 : index
    %18 = vector.load %arg4[%c0_13, %c0_14] : memref<1x32xf32, #tpu.memory_space<vmem>>, vector<1x32xf32>
    %19 = vector.broadcast %18 : vector<1x32xf32> to vector<129x32xf32>
    %20 = arith.addf %17, %19 : vector<129x32xf32>
    %cst_15 = arith.constant 0.000000e+00 : f32
    %21 = vector.broadcast %cst_15 : f32 to vector<129x32xf32>
    %22 = arith.cmpf oge, %20, %21 : vector<129x32xf32>
    %cst_16 = arith.constant 1.000000e-01 : f32
    %23 = vector.broadcast %cst_16 : f32 to vector<129x32xf32>
    %24 = arith.mulf %23, %20 : vector<129x32xf32>
    %25 = arith.select %22, %20, %24 : vector<129x32xi1>, vector<129x32xf32>
    %c0_17 = arith.constant 0 : index
    %c0_18 = arith.constant 0 : index
    %26 = vector.load %arg18[%c0_17, %c0_18] : memref<130x32xf32, #tpu.memory_space<vmem>>, vector<129x32xf32>
    tpu.vector_store %arg18[%c0_17, %c0_18], %25 {strides = array<i32>} : memref<130x32xf32, #tpu.memory_space<vmem>>, vector<129x32xf32>,
    %c0_i32_19 = arith.constant 0 : i32
    %27 = arith.cmpi eq, %arg1, %c0_i32_19 : i32
    %28 = arith.extui %27 : i1 to i32
    %c0_i32_20 = arith.constant 0 : i32
    %29 = arith.cmpi ne, %28, %c0_i32_20 : i32
    scf.if %29 {
      %cst_90 = arith.constant 0.000000e+00 : f32
      %124 = vector.broadcast %cst_90 : f32 to vector<1x32xf32>
      %c0_91 = arith.constant 0 : index
      %c0_92 = arith.constant 0 : index
      %125 = vector.load %arg18[%c0_91, %c0_92] : memref<130x32xf32, #tpu.memory_space<vmem>>, vector<1x32xf32>
      tpu.vector_store %arg18[%c0_91, %c0_92], %124 {strides = array<i32>} : memref<130x32xf32, #tpu.memory_space<vmem>>, vector<1x32xf32>,
    } else {
    }
    %c0_21 = arith.constant 0 : index
    %c0_22 = arith.constant 0 : index
    %30 = vector.load %arg18[%c0_21, %c0_22] : memref<130x32xf32, #tpu.memory_space<vmem>>, vector<128x32xf32>
    %31 = arith.truncf %30 : vector<128x32xf32> to vector<128x32xbf16>
    %c0_23 = arith.constant 0 : index
    %c0_24 = arith.constant 0 : index
    %32 = vector.load %arg5[%c0_23, %c0_24] : memref<64x32xbf16, #tpu.memory_space<vmem>>, vector<32x32xbf16>
    %cst_25 = arith.constant dense<0.000000e+00> : vector<128x32xf32>
    %33 = tpu.matmul %31, %32, %cst_25 {dimension_numbers = #tpu.dot_dimension_numbers<[1], [0], [0], [1], [0, 0, 1, 1], [], []>} : vector<128x32xbf16>, vector<32x32xbf16>, vector<128x32xf32> -> vector<128x32xf32>
    %c1_26 = arith.constant 1 : index
    %c0_27 = arith.constant 0 : index
    %34 = vector.load %arg18[%c1_26, %c0_27] : memref<130x32xf32, #tpu.memory_space<vmem>>, vector<128x32xf32>
    %35 = arith.truncf %34 : vector<128x32xf32> to vector<128x32xbf16>
    %c32 = arith.constant 32 : index
    %c0_28 = arith.constant 0 : index
    %36 = vector.load %arg5[%c32, %c0_28] : memref<64x32xbf16, #tpu.memory_space<vmem>>, vector<32x32xbf16>
    %cst_29 = arith.constant dense<0.000000e+00> : vector<128x32xf32>
    %37 = tpu.matmul %35, %36, %cst_29 {dimension_numbers = #tpu.dot_dimension_numbers<[1], [0], [0], [1], [0, 0, 1, 1], [], []>} : vector<128x32xbf16>, vector<32x32xbf16>, vector<128x32xf32> -> vector<128x32xf32>
    %38 = arith.addf %33, %37 : vector<128x32xf32>
    %c0_30 = arith.constant 0 : index
    %c0_31 = arith.constant 0 : index
    %39 = vector.load %arg6[%c0_30, %c0_31] : memref<1x32xf32, #tpu.memory_space<vmem>>, vector<1x32xf32>
    %40 = vector.broadcast %39 : vector<1x32xf32> to vector<128x32xf32>
    %41 = arith.addf %38, %40 : vector<128x32xf32>
    %cst_32 = arith.constant 0.000000e+00 : f32
    %42 = vector.broadcast %cst_32 : f32 to vector<128x32xf32>
    %43 = arith.cmpf oge, %41, %42 : vector<128x32xf32>
    %cst_33 = arith.constant 1.000000e-01 : f32
    %44 = vector.broadcast %cst_33 : f32 to vector<128x32xf32>
    %45 = arith.mulf %44, %41 : vector<128x32xf32>
    %46 = arith.select %43, %41, %45 : vector<128x32xi1>, vector<128x32xf32>
    %47 = arith.truncf %1 : vector<128x4xf32> to vector<128x4xbf16>
    %c0_34 = arith.constant 0 : index
    %c0_35 = arith.constant 0 : index
    %48 = vector.load %arg7[%c0_34, %c0_35] : memref<4x32xbf16, #tpu.memory_space<vmem>>, vector<4x32xbf16>
    %cst_36 = arith.constant dense<0.000000e+00> : vector<128x32xf32>
    %49 = tpu.matmul %47, %48, %cst_36 {dimension_numbers = #tpu.dot_dimension_numbers<[1], [0], [0], [1], [0, 0, 1, 1], [], []>} : vector<128x4xbf16>, vector<4x32xbf16>, vector<128x32xf32> -> vector<128x32xf32>
    %c0_37 = arith.constant 0 : index
    %c0_38 = arith.constant 0 : index
    %50 = vector.load %arg8[%c0_37, %c0_38] : memref<1x32xf32, #tpu.memory_space<vmem>>, vector<1x32xf32>
    %51 = vector.broadcast %50 : vector<1x32xf32> to vector<128x32xf32>
    %52 = arith.addf %49, %51 : vector<128x32xf32>
    %53 = arith.addf %46, %52 : vector<128x32xf32>
    %cst_39 = arith.constant 0.000000e+00 : f32
    %54 = vector.broadcast %cst_39 : f32 to vector<128x32xf32>
    %55 = arith.cmpf oge, %53, %54 : vector<128x32xf32>
    %cst_40 = arith.constant 1.000000e-01 : f32
    %56 = vector.broadcast %cst_40 : f32 to vector<128x32xf32>
    %57 = arith.mulf %56, %53 : vector<128x32xf32>
    %58 = arith.select %55, %53, %57 : vector<128x32xi1>, vector<128x32xf32>
    %c0_i32_41 = arith.constant 0 : i32
    %59 = arith.cmpi eq, %arg1, %c0_i32_41 : i32
    %60 = arith.extui %59 : i1 to i32
    %c0_i32_42 = arith.constant 0 : i32
    %61 = arith.cmpi ne, %60, %c0_i32_42 : i32
    scf.if %61 {
      %cst_90 = arith.constant 0.000000e+00 : f32
      %124 = vector.broadcast %cst_90 : f32 to vector<4x32xf32>
      %c0_91 = arith.constant 0 : index
      %c0_92 = arith.constant 0 : index
      %125 = vector.load %arg17[%c0_91, %c0_92] : memref<132x32xf32, #tpu.memory_space<vmem>>, vector<4x32xf32>
      tpu.vector_store %arg17[%c0_91, %c0_92], %124 {strides = array<i32>} : memref<132x32xf32, #tpu.memory_space<vmem>>, vector<4x32xf32>,
    } else {
    }
    %c0_i32_43 = arith.constant 0 : i32
    %62 = arith.cmpi sgt, %arg1, %c0_i32_43 : i32
    %63 = arith.extui %62 : i1 to i32
    %c0_i32_44 = arith.constant 0 : i32
    %64 = arith.cmpi ne, %63, %c0_i32_44 : i32
    scf.if %64 {
      %c128 = arith.constant 128 : index
      %c0_90 = arith.constant 0 : index
      %124 = vector.load %arg17[%c128, %c0_90] : memref<132x32xf32, #tpu.memory_space<vmem>>, vector<4x32xf32>
      %c0_91 = arith.constant 0 : index
      %c0_92 = arith.constant 0 : index
      %125 = vector.load %arg17[%c0_91, %c0_92] : memref<132x32xf32, #tpu.memory_space<vmem>>, vector<4x32xf32>
      tpu.vector_store %arg17[%c0_91, %c0_92], %124 {strides = array<i32>} : memref<132x32xf32, #tpu.memory_space<vmem>>, vector<4x32xf32>,
    } else {
    }
    %c4_45 = arith.constant 4 : index
    %c0_46 = arith.constant 0 : index
    %65 = vector.load %arg17[%c4_45, %c0_46] : memref<132x32xf32, #tpu.memory_space<vmem>>, vector<128x32xf32>
    tpu.vector_store %arg17[%c4_45, %c0_46], %58 {strides = array<i32>} : memref<132x32xf32, #tpu.memory_space<vmem>>, vector<128x32xf32>,
    %c0_47 = arith.constant 0 : index
    %c0_48 = arith.constant 0 : index
    %66 = vector.load %arg17[%c0_47, %c0_48] : memref<132x32xf32, #tpu.memory_space<vmem>>, vector<130x32xf32>
    %67 = arith.truncf %66 : vector<130x32xf32> to vector<130x32xbf16>
    %c0_49 = arith.constant 0 : index
    %c0_50 = arith.constant 0 : index
    %68 = vector.load %arg9[%c0_49, %c0_50] : memref<64x32xbf16, #tpu.memory_space<vmem>>, vector<32x32xbf16>
    %cst_51 = arith.constant dense<0.000000e+00> : vector<130x32xf32>
    %69 = tpu.matmul %67, %68, %cst_51 {dimension_numbers = #tpu.dot_dimension_numbers<[1], [0], [0], [1], [0, 0, 1, 1], [], []>} : vector<130x32xbf16>, vector<32x32xbf16>, vector<130x32xf32> -> vector<130x32xf32>
    %c2_52 = arith.constant 2 : index
    %c0_53 = arith.constant 0 : index
    %70 = vector.load %arg17[%c2_52, %c0_53] : memref<132x32xf32, #tpu.memory_space<vmem>>, vector<130x32xf32>
    %71 = arith.truncf %70 : vector<130x32xf32> to vector<130x32xbf16>
    %c32_54 = arith.constant 32 : index
    %c0_55 = arith.constant 0 : index
    %72 = vector.load %arg9[%c32_54, %c0_55] : memref<64x32xbf16, #tpu.memory_space<vmem>>, vector<32x32xbf16>
    %cst_56 = arith.constant dense<0.000000e+00> : vector<130x32xf32>
    %73 = tpu.matmul %71, %72, %cst_56 {dimension_numbers = #tpu.dot_dimension_numbers<[1], [0], [0], [1], [0, 0, 1, 1], [], []>} : vector<130x32xbf16>, vector<32x32xbf16>, vector<130x32xf32> -> vector<130x32xf32>
    %74 = arith.addf %69, %73 : vector<130x32xf32>
    %c0_57 = arith.constant 0 : index
    %c0_58 = arith.constant 0 : index
    %75 = vector.load %arg10[%c0_57, %c0_58] : memref<1x32xf32, #tpu.memory_space<vmem>>, vector<1x32xf32>
    %76 = vector.broadcast %75 : vector<1x32xf32> to vector<130x32xf32>
    %77 = arith.addf %74, %76 : vector<130x32xf32>
    %cst_59 = arith.constant 0.000000e+00 : f32
    %78 = vector.broadcast %cst_59 : f32 to vector<130x32xf32>
    %79 = arith.cmpf oge, %77, %78 : vector<130x32xf32>
    %cst_60 = arith.constant 1.000000e-01 : f32
    %80 = vector.broadcast %cst_60 : f32 to vector<130x32xf32>
    %81 = arith.mulf %80, %77 : vector<130x32xf32>
    %82 = arith.select %79, %77, %81 : vector<130x32xi1>, vector<130x32xf32>
    %c0_61 = arith.constant 0 : index
    %c0_62 = arith.constant 0 : index
    %83 = vector.load %arg18[%c0_61, %c0_62] : memref<130x32xf32, #tpu.memory_space<vmem>>, vector<130x32xf32>
    tpu.vector_store %arg18[%c0_61, %c0_62], %82 {strides = array<i32>} : memref<130x32xf32, #tpu.memory_space<vmem>>, vector<130x32xf32>,
    %c0_i32_63 = arith.constant 0 : i32
    %84 = arith.cmpi eq, %arg1, %c0_i32_63 : i32
    %85 = arith.extui %84 : i1 to i32
    %c0_i32_64 = arith.constant 0 : i32
    %86 = arith.cmpi ne, %85, %c0_i32_64 : i32
    scf.if %86 {
      %cst_90 = arith.constant 0.000000e+00 : f32
      %124 = vector.broadcast %cst_90 : f32 to vector<2x32xf32>
      %c0_91 = arith.constant 0 : index
      %c0_92 = arith.constant 0 : index
      %125 = vector.load %arg18[%c0_91, %c0_92] : memref<130x32xf32, #tpu.memory_space<vmem>>, vector<2x32xf32>
      tpu.vector_store %arg18[%c0_91, %c0_92], %124 {strides = array<i32>} : memref<130x32xf32, #tpu.memory_space<vmem>>, vector<2x32xf32>,
    } else {
    }
    %c0_65 = arith.constant 0 : index
    %c0_66 = arith.constant 0 : index
    %87 = vector.load %arg18[%c0_65, %c0_66] : memref<130x32xf32, #tpu.memory_space<vmem>>, vector<128x32xf32>
    %88 = arith.truncf %87 : vector<128x32xf32> to vector<128x32xbf16>
    %c0_67 = arith.constant 0 : index
    %c0_68 = arith.constant 0 : index
    %89 = vector.load %arg11[%c0_67, %c0_68] : memref<64x32xbf16, #tpu.memory_space<vmem>>, vector<32x32xbf16>
    %cst_69 = arith.constant dense<0.000000e+00> : vector<128x32xf32>
    %90 = tpu.matmul %88, %89, %cst_69 {dimension_numbers = #tpu.dot_dimension_numbers<[1], [0], [0], [1], [0, 0, 1, 1], [], []>} : vector<128x32xbf16>, vector<32x32xbf16>, vector<128x32xf32> -> vector<128x32xf32>
    %c2_70 = arith.constant 2 : index
    %c0_71 = arith.constant 0 : index
    %91 = vector.load %arg18[%c2_70, %c0_71] : memref<130x32xf32, #tpu.memory_space<vmem>>, vector<128x32xf32>
    %92 = arith.truncf %91 : vector<128x32xf32> to vector<128x32xbf16>
    %c32_72 = arith.constant 32 : index
    %c0_73 = arith.constant 0 : index
    %93 = vector.load %arg11[%c32_72, %c0_73] : memref<64x32xbf16, #tpu.memory_space<vmem>>, vector<32x32xbf16>
    %cst_74 = arith.constant dense<0.000000e+00> : vector<128x32xf32>
    %94 = tpu.matmul %92, %93, %cst_74 {dimension_numbers = #tpu.dot_dimension_numbers<[1], [0], [0], [1], [0, 0, 1, 1], [], []>} : vector<128x32xbf16>, vector<32x32xbf16>, vector<128x32xf32> -> vector<128x32xf32>
    %95 = arith.addf %90, %94 : vector<128x32xf32>
    %c0_75 = arith.constant 0 : index
    %c0_76 = arith.constant 0 : index
    %96 = vector.load %arg12[%c0_75, %c0_76] : memref<1x32xf32, #tpu.memory_space<vmem>>, vector<1x32xf32>
    %97 = vector.broadcast %96 : vector<1x32xf32> to vector<128x32xf32>
    %98 = arith.addf %95, %97 : vector<128x32xf32>
    %cst_77 = arith.constant 0.000000e+00 : f32
    %99 = vector.broadcast %cst_77 : f32 to vector<128x32xf32>
    %100 = arith.cmpf oge, %98, %99 : vector<128x32xf32>
    %cst_78 = arith.constant 1.000000e-01 : f32
    %101 = vector.broadcast %cst_78 : f32 to vector<128x32xf32>
    %102 = arith.mulf %101, %98 : vector<128x32xf32>
    %103 = arith.select %100, %98, %102 : vector<128x32xi1>, vector<128x32xf32>
    %104 = arith.addf %103, %58 : vector<128x32xf32>
    %cst_79 = arith.constant 0.000000e+00 : f32
    %105 = vector.broadcast %cst_79 : f32 to vector<128x32xf32>
    %106 = arith.cmpf oge, %104, %105 : vector<128x32xf32>
    %cst_80 = arith.constant 1.000000e-01 : f32
    %107 = vector.broadcast %cst_80 : f32 to vector<128x32xf32>
    %108 = arith.mulf %107, %104 : vector<128x32xf32>
    %109 = arith.select %106, %104, %108 : vector<128x32xi1>, vector<128x32xf32>
    %110 = arith.truncf %109 : vector<128x32xf32> to vector<128x32xbf16>
    %c0_81 = arith.constant 0 : index
    %c0_82 = arith.constant 0 : index
    %111 = vector.load %arg13[%c0_81, %c0_82] : memref<32x1xbf16, #tpu.memory_space<vmem>>, vector<32x1xbf16>
    %cst_83 = arith.constant dense<0.000000e+00> : vector<128x1xf32>
    %112 = tpu.matmul %110, %111, %cst_83 {dimension_numbers = #tpu.dot_dimension_numbers<[1], [0], [0], [1], [0, 0, 1, 1], [], []>} : vector<128x32xbf16>, vector<32x1xbf16>, vector<128x1xf32> -> vector<128x1xf32>
    %c0_84 = arith.constant 0 : index
    %c0_85 = arith.constant 0 : index
    %113 = vector.load %arg14[%c0_84, %c0_85] : memref<1x1xf32, #tpu.memory_space<vmem>>, vector<1x1xf32>
    %114 = vector.broadcast %113 : vector<1x1xf32> to vector<128x1xf32>
    %115 = arith.addf %112, %114 : vector<128x1xf32>
    %116 = arith.negf %115 : vector<128x1xf32>
    %117 = math.exp %116 : vector<128x1xf32>
    %cst_86 = arith.constant 1.000000e+00 : f32
    %118 = vector.broadcast %cst_86 : f32 to vector<128x1xf32>
    %119 = arith.addf %118, %117 : vector<128x1xf32>
    %120 = arith.divf %118, %119 : vector<128x1xf32>
    %c0_87 = arith.constant 0 : index
    %c0_88 = arith.constant 0 : index
    %c0_89 = arith.constant 0 : index
    %121 = vector.load %arg15[%c0_87, %c0_88, %c0_89] : memref<1x128x1xf32, #tpu.memory_space<vmem>>, vector<1x128x1xf32>
    %122 = vector.shape_cast %121 : vector<1x128x1xf32> to vector<128x1xf32>
    %123 = vector.shape_cast %120 : vector<128x1xf32> to vector<1x128x1xf32>
    tpu.vector_store %arg15[%c0_87, %c0_88, %c0_89], %123 {strides = array<i32>} : memref<1x128x1xf32, #tpu.memory_space<vmem>>, vector<1x128x1xf32>,
    return
  }
  func.func @transform_0(%arg0: i32, %arg1: i32) -> (i32, i32, i32) {
    %c0_i32 = arith.constant 0 : i32
    %c0_i32_0 = arith.constant 0 : i32
    return %arg0, %arg1, %c0_i32 : i32, i32, i32
  }
  func.func @transform_1(%arg0: i32, %arg1: i32) -> (i32, i32) {
    %c0_i32 = arith.constant 0 : i32
    %c0_i32_0 = arith.constant 0 : i32
    %c0_i32_1 = arith.constant 0 : i32
    return %c0_i32, %c0_i32_0 : i32, i32
  }
  func.func @transform_2(%arg0: i32, %arg1: i32) -> (i32, i32) {
    %c0_i32 = arith.constant 0 : i32
    %c0_i32_0 = arith.constant 0 : i32
    %c0_i32_1 = arith.constant 0 : i32
    return %c0_i32, %c0_i32_0 : i32, i32
  }
  func.func @transform_3(%arg0: i32, %arg1: i32) -> (i32, i32) {
    %c0_i32 = arith.constant 0 : i32
    %c0_i32_0 = arith.constant 0 : i32
    %c0_i32_1 = arith.constant 0 : i32
    return %c0_i32, %c0_i32_0 : i32, i32
  }
  func.func @transform_4(%arg0: i32, %arg1: i32) -> (i32, i32) {
    %c0_i32 = arith.constant 0 : i32
    %c0_i32_0 = arith.constant 0 : i32
    %c0_i32_1 = arith.constant 0 : i32
    return %c0_i32, %c0_i32_0 : i32, i32
  }
  func.func @transform_5(%arg0: i32, %arg1: i32) -> (i32, i32) {
    %c0_i32 = arith.constant 0 : i32
    %c0_i32_0 = arith.constant 0 : i32
    %c0_i32_1 = arith.constant 0 : i32
    return %c0_i32, %c0_i32_0 : i32, i32
  }
  func.func @transform_6(%arg0: i32, %arg1: i32) -> (i32, i32) {
    %c0_i32 = arith.constant 0 : i32
    %c0_i32_0 = arith.constant 0 : i32
    %c0_i32_1 = arith.constant 0 : i32
    return %c0_i32, %c0_i32_0 : i32, i32
  }
  func.func @transform_7(%arg0: i32, %arg1: i32) -> (i32, i32) {
    %c0_i32 = arith.constant 0 : i32
    %c0_i32_0 = arith.constant 0 : i32
    %c0_i32_1 = arith.constant 0 : i32
    return %c0_i32, %c0_i32_0 : i32, i32
  }
  func.func @transform_8(%arg0: i32, %arg1: i32) -> (i32, i32) {
    %c0_i32 = arith.constant 0 : i32
    %c0_i32_0 = arith.constant 0 : i32
    %c0_i32_1 = arith.constant 0 : i32
    return %c0_i32, %c0_i32_0 : i32, i32
  }
  func.func @transform_9(%arg0: i32, %arg1: i32) -> (i32, i32) {
    %c0_i32 = arith.constant 0 : i32
    %c0_i32_0 = arith.constant 0 : i32
    %c0_i32_1 = arith.constant 0 : i32
    return %c0_i32, %c0_i32_0 : i32, i32
  }
  func.func @transform_10(%arg0: i32, %arg1: i32) -> (i32, i32) {
    %c0_i32 = arith.constant 0 : i32
    %c0_i32_0 = arith.constant 0 : i32
    %c0_i32_1 = arith.constant 0 : i32
    return %c0_i32, %c0_i32_0 : i32, i32
  }
  func.func @transform_11(%arg0: i32, %arg1: i32) -> (i32, i32) {
    %c0_i32 = arith.constant 0 : i32
    %c0_i32_0 = arith.constant 0 : i32
    %c0_i32_1 = arith.constant 0 : i32
    return %c0_i32, %c0_i32_0 : i32, i32
  }
  func.func @transform_12(%arg0: i32, %arg1: i32) -> (i32, i32) {
    %c0_i32 = arith.constant 0 : i32
    %c0_i32_0 = arith.constant 0 : i32
    %c0_i32_1 = arith.constant 0 : i32
    return %c0_i32, %c0_i32_0 : i32, i32
  }
  func.func @transform_13(%arg0: i32, %arg1: i32) -> (i32, i32, i32) {
    %c0_i32 = arith.constant 0 : i32
    %c0_i32_0 = arith.constant 0 : i32
    return %arg0, %arg1, %c0_i32 : i32, i32, i32
  }
}

</mosaic_0001>

<llo_original>
// kernel: tpu_custom_call.1
$region0: #{tpu_custom_call.1}
  #allocation0 [shape = 'u32[]', space=smem, size = 0x4, offset = 0x4, fixed_abs, tag = 'smem constant byte address 0x4 - core index']
  #allocation1 [shape = 'u32[72,128]{1,0:T(1,128)}', space=vmem, size = 0x9000, scoped, tag = 'internal scratch']
  #allocation2 [shape = 'f32[130,4]{1,0:T(8,128)}', space=vmem, size = 0x11000, scoped, tag = 'scratch operand']
  #allocation3 [shape = 'f32[132,32]{1,0:T(8,128)}', space=vmem, size = 0x11000, scoped, tag = 'scratch operand']
  #allocation4 [shape = 'f32[130,32]{1,0:T(8,128)}', space=vmem, size = 0x11000, scoped, tag = 'scratch operand']
  #allocation5 [shape = 'f32[1,1]{1,0:T(1,128)S(1)}', space=vmem, size = 0x200, scoped, tag = 'scoped memory for tpu_custom_call.1']
  %s0 = inlined_call_operand.vmem [shape: f32[2,128,4], index: 0, kind: input, shape index: {}]
  %s1 = inlined_call_operand.vmem [shape: bf16[8,32], index: 1, kind: input, shape index: {}]
  %s2 = inlined_call_operand.vmem [shape: f32[1,32], index: 2, kind: input, shape index: {}]
  %s3 = inlined_call_operand.vmem [shape: bf16[64,32], index: 3, kind: input, shape index: {}]
  %s4 = inlined_call_operand.vmem [shape: f32[1,32], index: 4, kind: input, shape index: {}]
  %s5 = inlined_call_operand.vmem [shape: bf16[4,32], index: 5, kind: input, shape index: {}]
  %s6 = inlined_call_operand.vmem [shape: f32[1,32], index: 6, kind: input, shape index: {}]
  %s7 = inlined_call_operand.vmem [shape: bf16[64,32], index: 7, kind: input, shape index: {}]
  %s8 = inlined_call_operand.vmem [shape: f32[1,32], index: 8, kind: input, shape index: {}]
  %s9 = inlined_call_operand.vmem [shape: bf16[64,32], index: 9, kind: input, shape index: {}]
  %s10 = inlined_call_operand.vmem [shape: f32[1,32], index: 10, kind: input, shape index: {}]
  %s11 = inlined_call_operand.vmem [shape: bf16[32,1], index: 11, kind: input, shape index: {}]
  %s12 = inlined_call_operand.<no memory space> [shape: f32[1,1], index: 12, kind: input, shape index: {}]
  %s13 = inlined_call_operand.vmem [shape: f32[2,128,1], index: 13, kind: output, shape index: {}]
  %s14 = sld [smem:[#allocation0]]
  $region109: #{tpu_custom_call.1} parent=0
    _
  %s16 = ssub.s32 1, %s14
  %s17 = scalar_select 0, %s16, %s14
  %v18 = vstv %s12
  %19 = vst [vmem:[#allocation5] sm:$0x1] %v18
  loop: start=0, step=1, limit=4
  $region2: #{tpu_custom_call.1} parent=0 // loop_pre_header
    _
  $region3: #{tpu_custom_call.1} parent=0 // loop_header
    %s21 = sphi 0, %s25
    %p22 = scmp.ge.s32.totalorder %s21, 4
    %s28 = sphi 0, %s40
    %s29 = sphi 0, %s36
    %s30 = sphi 0, %s28
    %s31 = sphi 0, %s29
    %s32 = sphi 0, %s30
    %s33 = sphi 0, %s31
    %s45 = sphi 0, %s47
    %s48 = sphi 0, %s45
    %s49 = sphi 0, %s48
    %s65 = sphi 0, %s49
    %s69 = sphi 0, %s69
    %s71 = sphi 0, %s69
    %s72 = sphi 0, %s71
    %s86 = sphi 0, %s72
    %s90 = sphi 0, %s90
    %s92 = sphi 0, %s90
    %s93 = sphi 0, %s92
    %s107 = sphi 0, %s93
    %s111 = sphi 0, %s111
    %s113 = sphi 0, %s111
    %s114 = sphi 0, %s113
    %s128 = sphi 0, %s114
    %s132 = sphi 0, %s132
    %s134 = sphi 0, %s132
    %s135 = sphi 0, %s134
    %s149 = sphi 0, %s135
    %s153 = sphi 0, %s153
    %s155 = sphi 0, %s153
    %s156 = sphi 0, %s155
    %s170 = sphi 0, %s156
    %s174 = sphi 0, %s174
    %s176 = sphi 0, %s174
    %s177 = sphi 0, %s176
    %s191 = sphi 0, %s177
    %s195 = sphi 0, %s195
    %s197 = sphi 0, %s195
    %s198 = sphi 0, %s197
    %s212 = sphi 0, %s198
    %s216 = sphi 0, %s216
    %s218 = sphi 0, %s216
    %s219 = sphi 0, %s218
    %s233 = sphi 0, %s219
    %s237 = sphi 0, %s237
    %s239 = sphi 0, %s237
    %s240 = sphi 0, %s239
    %s254 = sphi 0, %s240
    %s258 = sphi 0, %s258
    %s260 = sphi 0, %s258
    %s261 = sphi 0, %s260
    %s275 = sphi 0, %s261
    %s279 = sphi 0, %s279
    %s281 = sphi 0, %s279
    %s282 = sphi 0, %s281
    %s296 = sphi 0, %s282
    %s300 = sphi 0, %s300
    %s302 = sphi 0, %s300
    %s303 = sphi 0, %s302
    %s317 = sphi 0, %s303
    %s325 = sphi 0, %s327
    %s328 = sphi 0, %s325
    %s329 = sphi 0, %s328
    %s345 = sphi 0, %s329
  $region4: #{tpu_custom_call.1} parent=0 // loop_header_branch
    %24 = sbr.rel (%p22) target = $region8
  $region5: #{tpu_custom_call.1} parent=0 // loop_body
    %s26 = ssub.s32 %s21, 1
    %s27 = ssub.s32 %s21, 2
    %s34 = sadd.s32 1, %s29
    %p35 = scmp.ge.s32.totalorder %s34, 1
    %s36 = scalar_select %p35, 0, %s34
    %s37 = sadd.s32 1, %s28
    %s38 = scalar_select %p35, %s37, %s28
    %p39 = scmp.ge.s32.totalorder %s38, 2
    %s40 = scalar_select %p39, 0, %s38
    %s41 = ssub.s32 %s28, %s40
    %s42 = ssub.s32 %s29, %s36
    %s43 = sor.u32 %s41, %s42
    %p44 = scmp.eq.s32.totalorder %s43, 0
    %s46 = sadd.s32 %s45, 1
    %s47 = scalar_select %p44, %s45, %s46
    %p50 = pneg %p44
    %p51 = scmp.eq.s32.totalorder %s21, 1
    %p52 = por %p50, %p51
    %p53 = scmp.ne.s32.totalorder %s45, %s48
    %p54 = scmp.eq.s32.totalorder %s21, 0
    %p55 = por %p53, %p54
    %p56 = scmp.ne.s32.totalorder %s45, %s48
    %p57 = scmp.eq.s32.totalorder %s26, 1
    %p58 = por %p56, %p57
    %p59 = scmp.ne.s32.totalorder %s48, %s49
    %p60 = scmp.eq.s32.totalorder %s26, 0
    %p61 = por %p59, %p60
    %p62 = scmp.ne.s32.totalorder %s48, %s49
    %p63 = scmp.eq.s32.totalorder %s27, 1
    %p64 = por %p62, %p63
    %p66 = scmp.ne.s32.totalorder %s49, %s65
    %p67 = scmp.eq.s32.totalorder %s27, 0
    %p68 = por %p66, %p67
    %s70 = sadd.s32 %s69, 1
    %p73 = scmp.eq.s32.totalorder %s21, 1
    %p74 = scmp.ne.s32.totalorder %s69, %s71
    %p75 = scmp.eq.s32.totalorder %s21, 0
    %p76 = por %p74, %p75
    %p77 = scmp.ne.s32.totalorder %s69, %s71
    %p78 = scmp.eq.s32.totalorder %s26, 1
    %p79 = por %p77, %p78
    %p80 = scmp.ne.s32.totalorder %s71, %s72
    %p81 = scmp.eq.s32.totalorder %s26, 0
    %p82 = por %p80, %p81
    %p83 = scmp.ne.s32.totalorder %s71, %s72
    %p84 = scmp.eq.s32.totalorder %s27, 1
    %p85 = por %p83, %p84
    %p87 = scmp.ne.s32.totalorder %s72, %s86
    %p88 = scmp.eq.s32.totalorder %s27, 0
    %p89 = por %p87, %p88
    %s91 = sadd.s32 %s90, 1
    %p94 = scmp.eq.s32.totalorder %s21, 1
    %p95 = scmp.ne.s32.totalorder %s90, %s92
    %p96 = scmp.eq.s32.totalorder %s21, 0
    %p97 = por %p95, %p96
    %p98 = scmp.ne.s32.totalorder %s90, %s92
    %p99 = scmp.eq.s32.totalorder %s26, 1
    %p100 = por %p98, %p99
    %p101 = scmp.ne.s32.totalorder %s92, %s93
    %p102 = scmp.eq.s32.totalorder %s26, 0
    %p103 = por %p101, %p102
    %p104 = scmp.ne.s32.totalorder %s92, %s93
    %p105 = scmp.eq.s32.totalorder %s27, 1
    %p106 = por %p104, %p105
    %p108 = scmp.ne.s32.totalorder %s93, %s107
    %p109 = scmp.eq.s32.totalorder %s27, 0
    %p110 = por %p108, %p109
    %s112 = sadd.s32 %s111, 1
    %p115 = scmp.eq.s32.totalorder %s21, 1
    %p116 = scmp.ne.s32.totalorder %s111, %s113
    %p117 = scmp.eq.s32.totalorder %s21, 0
    %p118 = por %p116, %p117
    %p119 = scmp.ne.s32.totalorder %s111, %s113
    %p120 = scmp.eq.s32.totalorder %s26, 1
    %p121 = por %p119, %p120
    %p122 = scmp.ne.s32.totalorder %s113, %s114
    %p123 = scmp.eq.s32.totalorder %s26, 0
    %p124 = por %p122, %p123
    %p125 = scmp.ne.s32.totalorder %s113, %s114
    %p126 = scmp.eq.s32.totalorder %s27, 1
    %p127 = por %p125, %p126
    %p129 = scmp.ne.s32.totalorder %s114, %s128
    %p130 = scmp.eq.s32.totalorder %s27, 0
    %p131 = por %p129, %p130
    %s133 = sadd.s32 %s132, 1
    %p136 = scmp.eq.s32.totalorder %s21, 1
    %p137 = scmp.ne.s32.totalorder %s132, %s134
    %p138 = scmp.eq.s32.totalorder %s21, 0
    %p139 = por %p137, %p138
    %p140 = scmp.ne.s32.totalorder %s132, %s134
    %p141 = scmp.eq.s32.totalorder %s26, 1
    %p142 = por %p140, %p141
    %p143 = scmp.ne.s32.totalorder %s134, %s135
    %p144 = scmp.eq.s32.totalorder %s26, 0
    %p145 = por %p143, %p144
    %p146 = scmp.ne.s32.totalorder %s134, %s135
    %p147 = scmp.eq.s32.totalorder %s27, 1
    %p148 = por %p146, %p147
    %p150 = scmp.ne.s32.totalorder %s135, %s149
    %p151 = scmp.eq.s32.totalorder %s27, 0
    %p152 = por %p150, %p151
    %s154 = sadd.s32 %s153, 1
    %p157 = scmp.eq.s32.totalorder %s21, 1
    %p158 = scmp.ne.s32.totalorder %s153, %s155
    %p159 = scmp.eq.s32.totalorder %s21, 0
    %p160 = por %p158, %p159
    %p161 = scmp.ne.s32.totalorder %s153, %s155
    %p162 = scmp.eq.s32.totalorder %s26, 1
    %p163 = por %p161, %p162
    %p164 = scmp.ne.s32.totalorder %s155, %s156
    %p165 = scmp.eq.s32.totalorder %s26, 0
    %p166 = por %p164, %p165
    %p167 = scmp.ne.s32.totalorder %s155, %s156
    %p168 = scmp.eq.s32.totalorder %s27, 1
    %p169 = por %p167, %p168
    %p171 = scmp.ne.s32.totalorder %s156, %s170
    %p172 = scmp.eq.s32.totalorder %s27, 0
    %p173 = por %p171, %p172
    %s175 = sadd.s32 %s174, 1
    %p178 = scmp.eq.s32.totalorder %s21, 1
    %p179 = scmp.ne.s32.totalorder %s174, %s176
    %p180 = scmp.eq.s32.totalorder %s21, 0
    %p181 = por %p179, %p180
    %p182 = scmp.ne.s32.totalorder %s174, %s176
    %p183 = scmp.eq.s32.totalorder %s26, 1
    %p184 = por %p182, %p183
    %p185 = scmp.ne.s32.totalorder %s176, %s177
    %p186 = scmp.eq.s32.totalorder %s26, 0
    %p187 = por %p185, %p186
    %p188 = scmp.ne.s32.totalorder %s176, %s177
    %p189 = scmp.eq.s32.totalorder %s27, 1
    %p190 = por %p188, %p189
    %p192 = scmp.ne.s32.totalorder %s177, %s191
    %p193 = scmp.eq.s32.totalorder %s27, 0
    %p194 = por %p192, %p193
    %s196 = sadd.s32 %s195, 1
    %p199 = scmp.eq.s32.totalorder %s21, 1
    %p200 = scmp.ne.s32.totalorder %s195, %s197
    %p201 = scmp.eq.s32.totalorder %s21, 0
    %p202 = por %p200, %p201
    %p203 = scmp.ne.s32.totalorder %s195, %s197
    %p204 = scmp.eq.s32.totalorder %s26, 1
    %p205 = por %p203, %p204
    %p206 = scmp.ne.s32.totalorder %s197, %s198
    %p207 = scmp.eq.s32.totalorder %s26, 0
    %p208 = por %p206, %p207
    %p209 = scmp.ne.s32.totalorder %s197, %s198
    %p210 = scmp.eq.s32.totalorder %s27, 1
    %p211 = por %p209, %p210
    %p213 = scmp.ne.s32.totalorder %s198, %s212
    %p214 = scmp.eq.s32.totalorder %s27, 0
    %p215 = por %p213, %p214
    %s217 = sadd.s32 %s216, 1
    %p220 = scmp.eq.s32.totalorder %s21, 1
    %p221 = scmp.ne.s32.totalorder %s216, %s218
    %p222 = scmp.eq.s32.totalorder %s21, 0
    %p223 = por %p221, %p222
    %p224 = scmp.ne.s32.totalorder %s216, %s218
    %p225 = scmp.eq.s32.totalorder %s26, 1
    %p226 = por %p224, %p225
    %p227 = scmp.ne.s32.totalorder %s218, %s219
    %p228 = scmp.eq.s32.totalorder %s26, 0
    %p229 = por %p227, %p228
    %p230 = scmp.ne.s32.totalorder %s218, %s219
    %p231 = scmp.eq.s32.totalorder %s27, 1
    %p232 = por %p230, %p231
    %p234 = scmp.ne.s32.totalorder %s219, %s233
    %p235 = scmp.eq.s32.totalorder %s27, 0
    %p236 = por %p234, %p235
    %s238 = sadd.s32 %s237, 1
    %p241 = scmp.eq.s32.totalorder %s21, 1
    %p242 = scmp.ne.s32.totalorder %s237, %s239
    %p243 = scmp.eq.s32.totalorder %s21, 0
    %p244 = por %p242, %p243
    %p245 = scmp.ne.s32.totalorder %s237, %s239
    %p246 = scmp.eq.s32.totalorder %s26, 1
    %p247 = por %p245, %p246
    %p248 = scmp.ne.s32.totalorder %s239, %s240
    %p249 = scmp.eq.s32.totalorder %s26, 0
    %p250 = por %p248, %p249
    %p251 = scmp.ne.s32.totalorder %s239, %s240
    %p252 = scmp.eq.s32.totalorder %s27, 1
    %p253 = por %p251, %p252
    %p255 = scmp.ne.s32.totalorder %s240, %s254
    %p256 = scmp.eq.s32.totalorder %s27, 0
    %p257 = por %p255, %p256
    %s259 = sadd.s32 %s258, 1
    %p262 = scmp.eq.s32.totalorder %s21, 1
    %p263 = scmp.ne.s32.totalorder %s258, %s260
    %p264 = scmp.eq.s32.totalorder %s21, 0
    %p265 = por %p263, %p264
    %p266 = scmp.ne.s32.totalorder %s258, %s260
    %p267 = scmp.eq.s32.totalorder %s26, 1
    %p268 = por %p266, %p267
    %p269 = scmp.ne.s32.totalorder %s260, %s261
    %p270 = scmp.eq.s32.totalorder %s26, 0
    %p271 = por %p269, %p270
    %p272 = scmp.ne.s32.totalorder %s260, %s261
    %p273 = scmp.eq.s32.totalorder %s27, 1
    %p274 = por %p272, %p273
    %p276 = scmp.ne.s32.totalorder %s261, %s275
    %p277 = scmp.eq.s32.totalorder %s27, 0
    %p278 = por %p276, %p277
    %s280 = sadd.s32 %s279, 1
    %p283 = scmp.eq.s32.totalorder %s21, 1
    %p284 = scmp.ne.s32.totalorder %s279, %s281
    %p285 = scmp.eq.s32.totalorder %s21, 0
    %p286 = por %p284, %p285
    %p287 = scmp.ne.s32.totalorder %s279, %s281
    %p288 = scmp.eq.s32.totalorder %s26, 1
    %p289 = por %p287, %p288
    %p290 = scmp.ne.s32.totalorder %s281, %s282
    %p291 = scmp.eq.s32.totalorder %s26, 0
    %p292 = por %p290, %p291
    %p293 = scmp.ne.s32.totalorder %s281, %s282
    %p294 = scmp.eq.s32.totalorder %s27, 1
    %p295 = por %p293, %p294
    %p297 = scmp.ne.s32.totalorder %s282, %s296
    %p298 = scmp.eq.s32.totalorder %s27, 0
    %p299 = por %p297, %p298
    %s301 = sadd.s32 %s300, 1
    %p304 = scmp.eq.s32.totalorder %s21, 1
    %p305 = scmp.ne.s32.totalorder %s300, %s302
    %p306 = scmp.eq.s32.totalorder %s21, 0
    %p307 = por %p305, %p306
    %p308 = scmp.ne.s32.totalorder %s300, %s302
    %p309 = scmp.eq.s32.totalorder %s26, 1
    %p310 = por %p308, %p309
    %p311 = scmp.ne.s32.totalorder %s302, %s303
    %p312 = scmp.eq.s32.totalorder %s26, 0
    %p313 = por %p311, %p312
    %p314 = scmp.ne.s32.totalorder %s302, %s303
    %p315 = scmp.eq.s32.totalorder %s27, 1
    %p316 = por %p314, %p315
    %p318 = scmp.ne.s32.totalorder %s303, %s317
    %p319 = scmp.eq.s32.totalorder %s27, 0
    %p320 = por %p318, %p319
    %s321 = ssub.s32 %s28, %s40
    %s322 = ssub.s32 %s29, %s36
    %s323 = sor.u32 %s321, %s322
    %p324 = scmp.eq.s32.totalorder %s323, 0
    %s326 = sadd.s32 %s325, 1
    %s327 = scalar_select %p324, %s325, %s326
    %p330 = pneg %p324
    %p331 = scmp.eq.s32.totalorder %s21, 1
    %p332 = por %p330, %p331
    %p333 = scmp.ne.s32.totalorder %s325, %s328
    %p334 = scmp.eq.s32.totalorder %s21, 0
    %p335 = por %p333, %p334
    %p336 = scmp.ne.s32.totalorder %s325, %s328
    %p337 = scmp.eq.s32.totalorder %s26, 1
    %p338 = por %p336, %p337
    %p339 = scmp.ne.s32.totalorder %s328, %s329
    %p340 = scmp.eq.s32.totalorder %s26, 0
    %p341 = por %p339, %p340
    %p342 = scmp.ne.s32.totalorder %s328, %s329
    %p343 = scmp.eq.s32.totalorder %s27, 1
    %p344 = por %p342, %p343
    %p346 = scmp.ne.s32.totalorder %s329, %s345
    %p347 = scmp.eq.s32.totalorder %s27, 0
    %p348 = por %p346, %p347
    %p349 = scmp.le.s32.totalorder 1, %s21
    %p350 = scmp.lt.s32.totalorder %s21, 3
    %p351 = pnand %p349, %p350
    %p352 = pneg %p351
    // Predicated region
    $region9: #{tpu_custom_call.1} parent=5 // pred_check
      _
    $region10: #{tpu_custom_call.1} parent=5 // pred_check_branch
      %354 = sbr.rel (%p351) target = $region12
    $region11: #{tpu_custom_call.1} parent=5 // pred_region
      %s355 = ssub.s32 %s21, 1
      // Predicated region
      $region13: #{tpu_custom_call.1} parent=11 // pred_check
        %p356 = pneg %p82
      $region14: #{tpu_custom_call.1} parent=11 // pred_check_branch
        %358 = sbr.rel (%p356) target = $region16
      $region15: #{tpu_custom_call.1} parent=11 // pred_region
        _
      $region16: #{tpu_custom_call.1} parent=11 // pred_fallthru
        _
      // Predicated region
      $region17: #{tpu_custom_call.1} parent=11 // pred_check
        %p359 = pneg %p103
      $region18: #{tpu_custom_call.1} parent=11 // pred_check_branch
        %361 = sbr.rel (%p359) target = $region20
      $region19: #{tpu_custom_call.1} parent=11 // pred_region
        _
      $region20: #{tpu_custom_call.1} parent=11 // pred_fallthru
        _
      // Predicated region
      $region21: #{tpu_custom_call.1} parent=11 // pred_check
        %p362 = pneg %p124
      $region22: #{tpu_custom_call.1} parent=11 // pred_check_branch
        %364 = sbr.rel (%p362) target = $region24
      $region23: #{tpu_custom_call.1} parent=11 // pred_region
        _
      $region24: #{tpu_custom_call.1} parent=11 // pred_fallthru
        _
      // Predicated region
      $region25: #{tpu_custom_call.1} parent=11 // pred_check
        %p365 = pneg %p145
      $region26: #{tpu_custom_call.1} parent=11 // pred_check_branch
        %367 = sbr.rel (%p365) target = $region28
      $region27: #{tpu_custom_call.1} parent=11 // pred_region
        _
      $region28: #{tpu_custom_call.1} parent=11 // pred_fallthru
        _
      // Predicated region
      $region29: #{tpu_custom_call.1} parent=11 // pred_check
        %p368 = pneg %p166
      $region30: #{tpu_custom_call.1} parent=11 // pred_check_branch
        %370 = sbr.rel (%p368) target = $region32
      $region31: #{tpu_custom_call.1} parent=11 // pred_region
        _
      $region32: #{tpu_custom_call.1} parent=11 // pred_fallthru
        _
      // Predicated region
      $region33: #{tpu_custom_call.1} parent=11 // pred_check
        %p371 = pneg %p187
      $region34: #{tpu_custom_call.1} parent=11 // pred_check_branch
        %373 = sbr.rel (%p371) target = $region36
      $region35: #{tpu_custom_call.1} parent=11 // pred_region
        _
      $region36: #{tpu_custom_call.1} parent=11 // pred_fallthru
        _
      // Predicated region
      $region37: #{tpu_custom_call.1} parent=11 // pred_check
        %p374 = pneg %p208
      $region38: #{tpu_custom_call.1} parent=11 // pred_check_branch
        %376 = sbr.rel (%p374) target = $region40
      $region39: #{tpu_custom_call.1} parent=11 // pred_region
        _
      $region40: #{tpu_custom_call.1} parent=11 // pred_fallthru
        _
      // Predicated region
      $region41: #{tpu_custom_call.1} parent=11 // pred_check
        %p377 = pneg %p229
      $region42: #{tpu_custom_call.1} parent=11 // pred_check_branch
        %379 = sbr.rel (%p377) target = $region44
      $region43: #{tpu_custom_call.1} parent=11 // pred_region
        _
      $region44: #{tpu_custom_call.1} parent=11 // pred_fallthru
        _
      // Predicated region
      $region45: #{tpu_custom_call.1} parent=11 // pred_check
        %p380 = pneg %p250
      $region46: #{tpu_custom_call.1} parent=11 // pred_check_branch
        %382 = sbr.rel (%p380) target = $region48
      $region47: #{tpu_custom_call.1} parent=11 // pred_region
        _
      $region48: #{tpu_custom_call.1} parent=11 // pred_fallthru
        _
      // Predicated region
      $region49: #{tpu_custom_call.1} parent=11 // pred_check
        %p383 = pneg %p271
      $region50: #{tpu_custom_call.1} parent=11 // pred_check_branch
        %385 = sbr.rel (%p383) target = $region52
      $region51: #{tpu_custom_call.1} parent=11 // pred_region
        _
      $region52: #{tpu_custom_call.1} parent=11 // pred_fallthru
        _
      // Predicated region
      $region53: #{tpu_custom_call.1} parent=11 // pred_check
        %p386 = pneg %p292
      $region54: #{tpu_custom_call.1} parent=11 // pred_check_branch
        %388 = sbr.rel (%p386) target = $region56
      $region55: #{tpu_custom_call.1} parent=11 // pred_region
        _
      $region56: #{tpu_custom_call.1} parent=11 // pred_fallthru
        _
      // Predicated region
      $region57: #{tpu_custom_call.1} parent=11 // pred_check
        %p389 = pneg %p313
      $region58: #{tpu_custom_call.1} parent=11 // pred_check_branch
        %391 = sbr.rel (%p389) target = $region60
      $region59: #{tpu_custom_call.1} parent=11 // pred_region
        _
      $region60: #{tpu_custom_call.1} parent=11 // pred_fallthru
        _
    $region12: #{tpu_custom_call.1} parent=5 // pred_fallthru
      _
    %p392 = scmp.lt.s32.totalorder %s21, 2
    // Predicated region
    $region61: #{tpu_custom_call.1} parent=5 // pred_check
      %p393 = pneg %p392
    $region62: #{tpu_custom_call.1} parent=5 // pred_check_branch
      %395 = sbr.rel (%p393) target = $region64
    $region63: #{tpu_custom_call.1} parent=5 // pred_region
      // Predicated region
      $region65: #{tpu_custom_call.1} parent=63 // pred_check
        %p396 = pneg %p55
      $region66: #{tpu_custom_call.1} parent=63 // pred_check_branch
        %398 = sbr.rel (%p396) target = $region68
      $region67: #{tpu_custom_call.1} parent=63 // pred_region
        %s399 = smul.u32 16, %s29
        %p400 = scmp.lt.s32.totalorder %s28, 1
        %s401 = scalar_select %p400, %s28, 1
        %p402 = scmp.lt.s32.totalorder %s399, 15
        %s403 = scalar_select %p402, %s399, 15
        %s404 = smul.addr %s401, 16
        %s405 = sadd.s32 %s403, %s404
        %s406 = smul.addr %s405, 8
        %s407 = scalar_lea.vmem %s0, %s406
        %s408 = smul.u32 16, %s29
      $region68: #{tpu_custom_call.1} parent=63 // pred_fallthru
        _
    $region64: #{tpu_custom_call.1} parent=5 // pred_fallthru
      _
    %p409 = scmp.le.s32.totalorder 1, %s21
    %p410 = scmp.lt.s32.totalorder %s21, 3
    %p411 = pnand %p409, %p410
    %p412 = pneg %p411
    // Predicated region
    $region69: #{tpu_custom_call.1} parent=5 // pred_check
      _
    $region70: #{tpu_custom_call.1} parent=5 // pred_check_branch
      %414 = sbr.rel (%p411) target = $region72
    $region71: #{tpu_custom_call.1} parent=5 // pred_region
      %s415 = ssub.s32 %s21, 1
      %s416 = smul.u32 16, %s31
      %p417 = scmp.lt.s32.totalorder %s30, 1
      %s418 = scalar_select %p417, %s30, 1
      %p419 = scmp.lt.s32.totalorder %s416, 15
      %s420 = scalar_select %p419, %s416, 15
      %s421 = smul.addr %s418, 16
      %s422 = sadd.s32 %s420, %s421
      %s423 = smul.addr %s422, 8
      %s424 = scalar_lea.vmem %s0, %s423
      %p425 = pneg %p61
      %p426 = pneg %p58
      %p427 = pneg %p82
      %p428 = pneg %p79
      %p429 = pneg %p103
      %p430 = pneg %p100
      %p431 = pneg %p124
      %p432 = pneg %p121
      %p433 = pneg %p145
      %p434 = pneg %p142
      %p435 = pneg %p166
      %p436 = pneg %p163
      %p437 = pneg %p187
      %p438 = pneg %p184
      %p439 = pneg %p208
      %p440 = pneg %p205
      %p441 = pneg %p229
      %p442 = pneg %p226
      %p443 = pneg %p250
      %p444 = pneg %p247
      %p445 = pneg %p271
      %p446 = pneg %p268
      %p447 = pneg %p292
      %p448 = pneg %p289
      %p449 = pneg %p313
      %p450 = pneg %p310
      %p451 = pneg %p341
      %p452 = pneg %p338
      %s453 = smul.u32 16, %s31
      %p454 = scmp.lt.s32.totalorder %s30, 1
      %s455 = scalar_select %p454, %s30, 1
      %p456 = scmp.lt.s32.totalorder %s453, 15
      %s457 = scalar_select %p456, %s453, 15
      %s458 = smul.addr %s455, 16
      %s459 = sadd.s32 %s457, %s458
      %s460 = smul.addr %s459, 8
      %s461 = scalar_lea.vmem %s13, %s460
      %s462 = smul.u32 16, %s31
      %p463 = scmp.lt.s32.totalorder %s30, 1
      %s464 = scalar_select %p463, %s30, 1
      %p465 = scmp.lt.s32.totalorder %s462, 15
      %s466 = scalar_select %p465, %s462, 15
      %s467 = smul.addr %s464, 16
      %s468 = sadd.s32 %s466, %s467
      %s469 = smul.addr %s468, 8
      %s470 = scalar_lea.vmem %s0, %s469
      %s471 = smul.u32 16, %s31
      %s472 = smul.u32 16, %s31
      %p473 = scmp.lt.s32.totalorder %s30, 1
      %s474 = scalar_select %p473, %s30, 1
      %p475 = scmp.lt.s32.totalorder %s472, 15
      %s476 = scalar_select %p475, %s472, 15
      %s477 = smul.addr %s474, 16
      %s478 = sadd.s32 %s476, %s477
      %s479 = smul.addr %s478, 8
      %s480 = scalar_lea.vmem %s13, %s479
      %s481 = smul.u32 16, %s31
      %v483 = vld [vmem:[%s470] sm:$0xff]
      %v484 = vld [vmem:[%s470 + $0x8] sm:$0xff]
      %v485 = vld [vmem:[%s470 + $0x10] sm:$0xff]
      %v486 = vld [vmem:[%s470 + $0x18] sm:$0xff]
      %v487 = vld [vmem:[%s470 + $0x20] sm:$0xff]
      %v488 = vld [vmem:[%s470 + $0x28] sm:$0xff]
      %v489 = vld [vmem:[%s470 + $0x30] sm:$0xff]
      %v490 = vld [vmem:[%s470 + $0x38] sm:$0xff]
      %v491 = vld [vmem:[%s470 + $0x40] sm:$0xff]
      %v492 = vld [vmem:[%s470 + $0x48] sm:$0xff]
      %v493 = vld [vmem:[%s470 + $0x50] sm:$0xff]
      %v494 = vld [vmem:[%s470 + $0x58] sm:$0xff]
      %v495 = vld [vmem:[%s470 + $0x60] sm:$0xff]
      %v496 = vld [vmem:[%s470 + $0x68] sm:$0xff]
      %v497 = vld [vmem:[%s470 + $0x70] sm:$0xff]
      %v498 = vld [vmem:[%s470 + $0x78] sm:$0xff]
      %p499 = scmp.eq.s32.totalorder %s31, 0
      // Predicated region
      $region73: #{tpu_custom_call.1} parent=71 // pred_check
        %p500 = pneg %p499
      $region74: #{tpu_custom_call.1} parent=71 // pred_check_branch
        %502 = sbr.rel (%p500) target = $region76
      $region75: #{tpu_custom_call.1} parent=71 // pred_region
        %vm503 = vcmask 25600
        %504 = vst.msk [vmem:[#allocation2] sm:$0x3] %vm503, 0.0
      $region76: #{tpu_custom_call.1} parent=71 // pred_fallthru
        _
      %p505 = scmp.gt.s32.totalorder %s31, 0
      // Predicated region
      $region77: #{tpu_custom_call.1} parent=71 // pred_check
        %p506 = pneg %p505
      $region78: #{tpu_custom_call.1} parent=71 // pred_check_branch
        %508 = sbr.rel (%p506) target = $region80
      $region79: #{tpu_custom_call.1} parent=71 // pred_region
        %v509 = vld [vmem:[#allocation2 + $0x80] sm:$0x3]
        %vm510 = vcmask 25600
        %511 = vst.msk [vmem:[#allocation2] sm:$0x3] %vm510, %v509
      $region80: #{tpu_custom_call.1} parent=71 // pred_fallthru
        _
      %vm512 = vcmask 31744
      %513 = vst.msk [vmem:[#allocation2 + $0x2] sm:$0xff] %vm512, %v483
      %514 = vst.msk [vmem:[#allocation2 + $0xa] sm:$0xff] %vm512, %v484
      %515 = vst.msk [vmem:[#allocation2 + $0x12] sm:$0xff] %vm512, %v485
      %516 = vst.msk [vmem:[#allocation2 + $0x1a] sm:$0xff] %vm512, %v486
      %517 = vst.msk [vmem:[#allocation2 + $0x22] sm:$0xff] %vm512, %v487
      %518 = vst.msk [vmem:[#allocation2 + $0x2a] sm:$0xff] %vm512, %v488
      %519 = vst.msk [vmem:[#allocation2 + $0x32] sm:$0xff] %vm512, %v489
      %520 = vst.msk [vmem:[#allocation2 + $0x3a] sm:$0xff] %vm512, %v490
      %521 = vst.msk [vmem:[#allocation2 + $0x42] sm:$0xff] %vm512, %v491
      %522 = vst.msk [vmem:[#allocation2 + $0x4a] sm:$0xff] %vm512, %v492
      %523 = vst.msk [vmem:[#allocation2 + $0x52] sm:$0xff] %vm512, %v493
      %524 = vst.msk [vmem:[#allocation2 + $0x5a] sm:$0xff] %vm512, %v494
      %525 = vst.msk [vmem:[#allocation2 + $0x62] sm:$0xff] %vm512, %v495
      %526 = vst.msk [vmem:[#allocation2 + $0x6a] sm:$0xff] %vm512, %v496
      %527 = vst.msk [vmem:[#allocation2 + $0x72] sm:$0xff] %vm512, %v497
      %528 = vst.msk [vmem:[#allocation2 + $0x7a] sm:$0xff] %vm512, %v498
      %v529 = vld [vmem:[#allocation2] sm:$0xff]
      %v530 = vld [vmem:[#allocation2 + $0x8] sm:$0xff]
      %v531 = vld [vmem:[#allocation2 + $0x10] sm:$0xff]
      %v532 = vld [vmem:[#allocation2 + $0x18] sm:$0xff]
      %v533 = vld [vmem:[#allocation2 + $0x20] sm:$0xff]
      %v534 = vld [vmem:[#allocation2 + $0x28] sm:$0xff]
      %v535 = vld [vmem:[#allocation2 + $0x30] sm:$0xff]
      %v536 = vld [vmem:[#allocation2 + $0x38] sm:$0xff]
      %v537 = vld [vmem:[#allocation2 + $0x40] sm:$0xff]
      %v538 = vld [vmem:[#allocation2 + $0x48] sm:$0xff]
      %v539 = vld [vmem:[#allocation2 + $0x50] sm:$0xff]
      %v540 = vld [vmem:[#allocation2 + $0x58] sm:$0xff]
      %v541 = vld [vmem:[#allocation2 + $0x60] sm:$0xff]
      %v542 = vld [vmem:[#allocation2 + $0x68] sm:$0xff]
      %v543 = vld [vmem:[#allocation2 + $0x70] sm:$0xff]
      %v544 = vld [vmem:[#allocation2 + $0x78] sm:$0xff]
      %v545 = vld [vmem:[#allocation2 + $0x80] sm:$0x1]
      %v546 = vpack.c.bf16 %v530, %v529
      %v547 = vpack.c.bf16 %v532, %v531
      %v548 = vpack.c.bf16 %v534, %v533
      %v549 = vpack.c.bf16 %v536, %v535
      %v550 = vpack.c.bf16 %v538, %v537
      %v551 = vpack.c.bf16 %v540, %v539
      %v552 = vpack.c.bf16 %v542, %v541
      %v553 = vpack.c.bf16 %v544, %v543
      %v554 = vpack.c.bf16 %v545, %v545
      %v555 = vld [vmem:[%s1] sm:$0x3]
      %v556 = vld [vmem:[#allocation2 + $0x1] sm:$0xff]
      %v557 = vld [vmem:[#allocation2 + $0x9] sm:$0xff]
      %v558 = vld [vmem:[#allocation2 + $0x11] sm:$0xff]
      %v559 = vld [vmem:[#allocation2 + $0x19] sm:$0xff]
      %v560 = vld [vmem:[#allocation2 + $0x21] sm:$0xff]
      %v561 = vld [vmem:[#allocation2 + $0x29] sm:$0xff]
      %v562 = vld [vmem:[#allocation2 + $0x31] sm:$0xff]
      %v563 = vld [vmem:[#allocation2 + $0x39] sm:$0xff]
      %v564 = vld [vmem:[#allocation2 + $0x41] sm:$0xff]
      %v565 = vld [vmem:[#allocation2 + $0x49] sm:$0xff]
      %v566 = vld [vmem:[#allocation2 + $0x51] sm:$0xff]
      %v567 = vld [vmem:[#allocation2 + $0x59] sm:$0xff]
      %v568 = vld [vmem:[#allocation2 + $0x61] sm:$0xff]
      %v569 = vld [vmem:[#allocation2 + $0x69] sm:$0xff]
      %v570 = vld [vmem:[#allocation2 + $0x71] sm:$0xff]
      %v571 = vld [vmem:[#allocation2 + $0x79] sm:$0xff]
      %v572 = vld [vmem:[#allocation2 + $0x81] sm:$0x1]
      %v573 = vpack.c.bf16 %v557, %v556
      %v574 = vpack.c.bf16 %v559, %v558
      %v575 = vpack.c.bf16 %v561, %v560
      %v576 = vpack.c.bf16 %v563, %v562
      %v577 = vpack.c.bf16 %v565, %v564
      %v578 = vpack.c.bf16 %v567, %v566
      %v579 = vpack.c.bf16 %v569, %v568
      %v580 = vpack.c.bf16 %v571, %v570
      %v581 = vpack.c.bf16 %v572, %v572
      %v582 = vld [vmem:[%s1] sm:$0xc]
      %v584 = vunpack.c.l.b16 %v582
      %v585 = vpack.c.b16 %v584, %v584
      %v586 = vrot.slane %v585, 2
      %v588 = vsel %vm512, %v573, 0
      %v591 = vsel %vm512, %v574, 0
      %v594 = vsel %vm512, %v575, 0
      %v597 = vsel %vm512, %v576, 0
      %v600 = vsel %vm512, %v577, 0
      %v603 = vsel %vm512, %v578, 0
      %v606 = vsel %vm512, %v579, 0
      %v609 = vsel %vm512, %v580, 0
      %v612 = vsel %vm512, %v581, 0
      %vm614 = vcmask 1041408
      %v616 = vsel %vm614, %v586, 0
      %618 = vmatpush.bf16.msra.mxu0 0
      %619 = vmatpush.bf16.msra.mxu0 0
      %620 = vmatpush.bf16.msra.mxu0 0
      %621 = vmatpush.bf16.msra.mxu0 0
      %622 = vmatpush.bf16.msra.mxu0 0
      %623 = vmatpush.bf16.msra.mxu0 0
      %624 = vmatpush.bf16.msra.mxu0 0
      %625 = vmatpush.bf16.msra.mxu0 %v616
      %626 = vmatmul.bf16.gmra.mxu0 %v588
      %v627 = vpop.f32.mrf.mxu0
      %v628 = vadd.f32 0.0, %v627
      %v629 = vpop.f32.mrf.mxu0
      %v630 = vadd.f32 0.0, %v629
      %631 = vmatmul.bf16.gmra.mxu0 %v591
      %v632 = vpop.f32.mrf.mxu0
      %v633 = vadd.f32 0.0, %v632
      %v634 = vpop.f32.mrf.mxu0
      %v635 = vadd.f32 0.0, %v634
      %636 = vmatmul.bf16.gmra.mxu0 %v594
      %v637 = vpop.f32.mrf.mxu0
      %v638 = vadd.f32 0.0, %v637
      %v639 = vpop.f32.mrf.mxu0
      %v640 = vadd.f32 0.0, %v639
      %641 = vmatmul.bf16.gmra.mxu0 %v597
      %v642 = vpop.f32.mrf.mxu0
      %v643 = vadd.f32 0.0, %v642
      %v644 = vpop.f32.mrf.mxu0
      %v645 = vadd.f32 0.0, %v644
      %646 = vmatmul.bf16.gmra.mxu0 %v600
      %v647 = vpop.f32.mrf.mxu0
      %v648 = vadd.f32 0.0, %v647
      %v649 = vpop.f32.mrf.mxu0
      %v650 = vadd.f32 0.0, %v649
      %651 = vmatmul.bf16.gmra.mxu0 %v603
      %v652 = vpop.f32.mrf.mxu0
      %v653 = vadd.f32 0.0, %v652
      %v654 = vpop.f32.mrf.mxu0
      %v655 = vadd.f32 0.0, %v654
      %656 = vmatmul.bf16.gmra.mxu0 %v606
      %v657 = vpop.f32.mrf.mxu0
      %v658 = vadd.f32 0.0, %v657
      %v659 = vpop.f32.mrf.mxu0
      %v660 = vadd.f32 0.0, %v659
      %661 = vmatmul.bf16.gmra.mxu0 %v609
      %v662 = vpop.f32.mrf.mxu0
      %v663 = vadd.f32 0.0, %v662
      %v664 = vpop.f32.mrf.mxu0
      %v665 = vadd.f32 0.0, %v664
      %666 = vmatmul.bf16.gmra.mxu0 %v612
      %v667 = vpop.f32.mrf.mxu0
      %v668 = vadd.f32 0.0, %v667
      %v669 = vpop.f32.mrf.mxu0
      %670 = vdwg.mxu0
      %v672 = vsel %vm512, %v546, 0
      %v675 = vsel %vm512, %v547, 0
      %v678 = vsel %vm512, %v548, 0
      %v681 = vsel %vm512, %v549, 0
      %v684 = vsel %vm512, %v550, 0
      %v687 = vsel %vm512, %v551, 0
      %v690 = vsel %vm512, %v552, 0
      %v693 = vsel %vm512, %v553, 0
      %v696 = vsel %vm512, %v554, 0
      %v699 = vsel %vm614, %v555, 0
      %701 = vmatpush.bf16.msra.mxu0 0
      %702 = vmatpush.bf16.msra.mxu0 0
      %703 = vmatpush.bf16.msra.mxu0 0
      %704 = vmatpush.bf16.msra.mxu0 0
      %705 = vmatpush.bf16.msra.mxu0 0
      %706 = vmatpush.bf16.msra.mxu0 0
      %707 = vmatpush.bf16.msra.mxu0 0
      %708 = vmatpush.bf16.msra.mxu0 %v699
      %709 = vmatmul.bf16.gmra.mxu0 %v672
      %v710 = vpop.f32.mrf.mxu0
      %v711 = vadd.f32 %v628, %v710
      %v712 = vpop.f32.mrf.mxu0
      %v713 = vadd.f32 %v630, %v712
      %714 = vmatmul.bf16.gmra.mxu0 %v675
      %v715 = vpop.f32.mrf.mxu0
      %v716 = vadd.f32 %v633, %v715
      %v717 = vpop.f32.mrf.mxu0
      %v718 = vadd.f32 %v635, %v717
      %719 = vmatmul.bf16.gmra.mxu0 %v678
      %v720 = vpop.f32.mrf.mxu0
      %v721 = vadd.f32 %v638, %v720
      %v722 = vpop.f32.mrf.mxu0
      %v723 = vadd.f32 %v640, %v722
      %724 = vmatmul.bf16.gmra.mxu0 %v681
      %v725 = vpop.f32.mrf.mxu0
      %v726 = vadd.f32 %v643, %v725
      %v727 = vpop.f32.mrf.mxu0
      %v728 = vadd.f32 %v645, %v727
      %729 = vmatmul.bf16.gmra.mxu0 %v684
      %v730 = vpop.f32.mrf.mxu0
      %v731 = vadd.f32 %v648, %v730
      %v732 = vpop.f32.mrf.mxu0
      %v733 = vadd.f32 %v650, %v732
      %734 = vmatmul.bf16.gmra.mxu0 %v687
      %v735 = vpop.f32.mrf.mxu0
      %v736 = vadd.f32 %v653, %v735
      %v737 = vpop.f32.mrf.mxu0
      %v738 = vadd.f32 %v655, %v737
      %739 = vmatmul.bf16.gmra.mxu0 %v690
      %v740 = vpop.f32.mrf.mxu0
      %v741 = vadd.f32 %v658, %v740
      %v742 = vpop.f32.mrf.mxu0
      %v743 = vadd.f32 %v660, %v742
      %744 = vmatmul.bf16.gmra.mxu0 %v693
      %v745 = vpop.f32.mrf.mxu0
      %v746 = vadd.f32 %v663, %v745
      %v747 = vpop.f32.mrf.mxu0
      %v748 = vadd.f32 %v665, %v747
      %749 = vmatmul.bf16.gmra.mxu0 %v696
      %v750 = vpop.f32.mrf.mxu0
      %v751 = vadd.f32 %v668, %v750
      %v752 = vpop.f32.mrf.mxu0
      %753 = vdwg.mxu0
      %v754 = vld [vmem:[%s2] sm:$0x1]
      %v756 = vperm.slane %v754, 0
      %v758 = vadd.f32 %v711, %v756
      %v759 = vadd.f32 %v713, %v756
      %v760 = vadd.f32 %v716, %v756
      %v761 = vadd.f32 %v718, %v756
      %v762 = vadd.f32 %v721, %v756
      %v763 = vadd.f32 %v723, %v756
      %v764 = vadd.f32 %v726, %v756
      %v765 = vadd.f32 %v728, %v756
      %v766 = vadd.f32 %v731, %v756
      %v767 = vadd.f32 %v733, %v756
      %v768 = vadd.f32 %v736, %v756
      %v769 = vadd.f32 %v738, %v756
      %v770 = vadd.f32 %v741, %v756
      %v771 = vadd.f32 %v743, %v756
      %v772 = vadd.f32 %v746, %v756
      %v773 = vadd.f32 %v748, %v756
      %v774 = vadd.f32 %v751, %v756
      %vm775 = vcmp.ge.f32.partialorder %v758, 0.0
      %vm776 = vcmp.ge.f32.partialorder %v759, 0.0
      %vm777 = vcmp.ge.f32.partialorder %v760, 0.0
      %vm778 = vcmp.ge.f32.partialorder %v761, 0.0
      %vm779 = vcmp.ge.f32.partialorder %v762, 0.0
      %vm780 = vcmp.ge.f32.partialorder %v763, 0.0
      %vm781 = vcmp.ge.f32.partialorder %v764, 0.0
      %vm782 = vcmp.ge.f32.partialorder %v765, 0.0
      %vm783 = vcmp.ge.f32.partialorder %v766, 0.0
      %vm784 = vcmp.ge.f32.partialorder %v767, 0.0
      %vm785 = vcmp.ge.f32.partialorder %v768, 0.0
      %vm786 = vcmp.ge.f32.partialorder %v769, 0.0
      %vm787 = vcmp.ge.f32.partialorder %v770, 0.0
      %vm788 = vcmp.ge.f32.partialorder %v771, 0.0
      %vm789 = vcmp.ge.f32.partialorder %v772, 0.0
      %vm790 = vcmp.ge.f32.partialorder %v773, 0.0
      %vm791 = vcmp.ge.f32.partialorder %v774, 0.0
      %v792 = vmul.f32 %v758, 0.1
      %v793 = vmul.f32 %v759, 0.1
      %v794 = vmul.f32 %v760, 0.1
      %v795 = vmul.f32 %v761, 0.1
      %v796 = vmul.f32 %v762, 0.1
      %v797 = vmul.f32 %v763, 0.1
      %v798 = vmul.f32 %v764, 0.1
      %v799 = vmul.f32 %v765, 0.1
      %v800 = vmul.f32 %v766, 0.1
      %v801 = vmul.f32 %v767, 0.1
      %v802 = vmul.f32 %v768, 0.1
      %v803 = vmul.f32 %v769, 0.1
      %v804 = vmul.f32 %v770, 0.1
      %v805 = vmul.f32 %v771, 0.1
      %v806 = vmul.f32 %v772, 0.1
      %v807 = vmul.f32 %v773, 0.1
      %v808 = vmul.f32 %v774, 0.1
      %v809 = vsel %vm775, %v758, %v792
      %v810 = vsel %vm776, %v759, %v793
      %v811 = vsel %vm777, %v760, %v794
      %v812 = vsel %vm778, %v761, %v795
      %v813 = vsel %vm779, %v762, %v796
      %v814 = vsel %vm780, %v763, %v797
      %v815 = vsel %vm781, %v764, %v798
      %v816 = vsel %vm782, %v765, %v799
      %v817 = vsel %vm783, %v766, %v800
      %v818 = vsel %vm784, %v767, %v801
      %v819 = vsel %vm785, %v768, %v802
      %v820 = vsel %vm786, %v769, %v803
      %v821 = vsel %vm787, %v770, %v804
      %v822 = vsel %vm788, %v771, %v805
      %v823 = vsel %vm789, %v772, %v806
      %v824 = vsel %vm790, %v773, %v807
      %v825 = vsel %vm791, %v774, %v808
      %vm826 = vcmask 261120
      %827 = vst.msk [vmem:[#allocation4] sm:$0xff] %vm826, %v809
      %828 = vst.msk [vmem:[#allocation4 + $0x8] sm:$0xff] %vm826, %v810
      %829 = vst.msk [vmem:[#allocation4 + $0x10] sm:$0xff] %vm826, %v811
      %830 = vst.msk [vmem:[#allocation4 + $0x18] sm:$0xff] %vm826, %v812
      %831 = vst.msk [vmem:[#allocation4 + $0x20] sm:$0xff] %vm826, %v813
      %832 = vst.msk [vmem:[#allocation4 + $0x28] sm:$0xff] %vm826, %v814
      %833 = vst.msk [vmem:[#allocation4 + $0x30] sm:$0xff] %vm826, %v815
      %834 = vst.msk [vmem:[#allocation4 + $0x38] sm:$0xff] %vm826, %v816
      %835 = vst.msk [vmem:[#allocation4 + $0x40] sm:$0xff] %vm826, %v817
      %836 = vst.msk [vmem:[#allocation4 + $0x48] sm:$0xff] %vm826, %v818
      %837 = vst.msk [vmem:[#allocation4 + $0x50] sm:$0xff] %vm826, %v819
      %838 = vst.msk [vmem:[#allocation4 + $0x58] sm:$0xff] %vm826, %v820
      %839 = vst.msk [vmem:[#allocation4 + $0x60] sm:$0xff] %vm826, %v821
      %840 = vst.msk [vmem:[#allocation4 + $0x68] sm:$0xff] %vm826, %v822
      %841 = vst.msk [vmem:[#allocation4 + $0x70] sm:$0xff] %vm826, %v823
      %842 = vst.msk [vmem:[#allocation4 + $0x78] sm:$0xff] %vm826, %v824
      %vm843 = vcmask 253952
      %844 = vst.msk [vmem:[#allocation4 + $0x80] sm:$0x1] %vm843, %v825
      // Predicated region
      $region81: #{tpu_custom_call.1} parent=71 // pred_check
        %p845 = pneg %p499
      $region82: #{tpu_custom_call.1} parent=71 // pred_check_branch
        %847 = sbr.rel (%p845) target = $region84
      $region83: #{tpu_custom_call.1} parent=71 // pred_region
        %848 = vst.msk [vmem:[#allocation4] sm:$0x1] %vm843, 0.0
      $region84: #{tpu_custom_call.1} parent=71 // pred_fallthru
        _
      %v849 = vld [vmem:[#allocation4] sm:$0xff]
      %v850 = vld [vmem:[#allocation4 + $0x8] sm:$0xff]
      %v851 = vld [vmem:[#allocation4 + $0x10] sm:$0xff]
      %v852 = vld [vmem:[#allocation4 + $0x18] sm:$0xff]
      %v853 = vld [vmem:[#allocation4 + $0x20] sm:$0xff]
      %v854 = vld [vmem:[#allocation4 + $0x28] sm:$0xff]
      %v855 = vld [vmem:[#allocation4 + $0x30] sm:$0xff]
      %v856 = vld [vmem:[#allocation4 + $0x38] sm:$0xff]
      %v857 = vld [vmem:[#allocation4 + $0x40] sm:$0xff]
      %v858 = vld [vmem:[#allocation4 + $0x48] sm:$0xff]
      %v859 = vld [vmem:[#allocation4 + $0x50] sm:$0xff]
      %v860 = vld [vmem:[#allocation4 + $0x58] sm:$0xff]
      %v861 = vld [vmem:[#allocation4 + $0x60] sm:$0xff]
      %v862 = vld [vmem:[#allocation4 + $0x68] sm:$0xff]
      %v863 = vld [vmem:[#allocation4 + $0x70] sm:$0xff]
      %v864 = vld [vmem:[#allocation4 + $0x78] sm:$0xff]
      %v865 = vpack.c.bf16 %v850, %v849
      %v866 = vpack.c.bf16 %v852, %v851
      %v867 = vpack.c.bf16 %v854, %v853
      %v868 = vpack.c.bf16 %v856, %v855
      %v869 = vpack.c.bf16 %v858, %v857
      %v870 = vpack.c.bf16 %v860, %v859
      %v871 = vpack.c.bf16 %v862, %v861
      %v872 = vpack.c.bf16 %v864, %v863
      %v873 = vld [vmem:[%s3] sm:$0xf]
      %v874 = vld [vmem:[%s3 + $0x4] sm:$0xf]
      %v875 = vld [vmem:[%s3 + $0x8] sm:$0xf]
      %v876 = vld [vmem:[%s3 + $0xc] sm:$0xf]
      %v877 = vld [vmem:[#allocation4 + $0x1] sm:$0xff]
      %v878 = vld [vmem:[#allocation4 + $0x9] sm:$0xff]
      %v879 = vld [vmem:[#allocation4 + $0x11] sm:$0xff]
      %v880 = vld [vmem:[#allocation4 + $0x19] sm:$0xff]
      %v881 = vld [vmem:[#allocation4 + $0x21] sm:$0xff]
      %v882 = vld [vmem:[#allocation4 + $0x29] sm:$0xff]
      %v883 = vld [vmem:[#allocation4 + $0x31] sm:$0xff]
      %v884 = vld [vmem:[#allocation4 + $0x39] sm:$0xff]
      %v885 = vld [vmem:[#allocation4 + $0x41] sm:$0xff]
      %v886 = vld [vmem:[#allocation4 + $0x49] sm:$0xff]
      %v887 = vld [vmem:[#allocation4 + $0x51] sm:$0xff]
      %v888 = vld [vmem:[#allocation4 + $0x59] sm:$0xff]
      %v889 = vld [vmem:[#allocation4 + $0x61] sm:$0xff]
      %v890 = vld [vmem:[#allocation4 + $0x69] sm:$0xff]
      %v891 = vld [vmem:[#allocation4 + $0x71] sm:$0xff]
      %v892 = vld [vmem:[#allocation4 + $0x79] sm:$0xff]
      %v893 = vpack.c.bf16 %v878, %v877
      %v894 = vpack.c.bf16 %v880, %v879
      %v895 = vpack.c.bf16 %v882, %v881
      %v896 = vpack.c.bf16 %v884, %v883
      %v897 = vpack.c.bf16 %v886, %v885
      %v898 = vpack.c.bf16 %v888, %v887
      %v899 = vpack.c.bf16 %v890, %v889
      %v900 = vpack.c.bf16 %v892, %v891
      %v901 = vld [vmem:[%s3 + $0x10] sm:$0xf]
      %v902 = vld [vmem:[%s3 + $0x14] sm:$0xf]
      %v903 = vld [vmem:[%s3 + $0x18] sm:$0xf]
      %v904 = vld [vmem:[%s3 + $0x1c] sm:$0xf]
      %v909 = vunpack.c.l.b16 %v901
      %v910 = vunpack.c.l.b16 %v902
      %v911 = vunpack.c.l.b16 %v903
      %v912 = vunpack.c.l.b16 %v904
      %v913 = vpack.c.b16 %v910, %v909
      %v914 = vpack.c.b16 %v912, %v911
      %v918 = vsel %vm826, %v893, 0
      %v921 = vsel %vm826, %v894, 0
      %v924 = vsel %vm826, %v895, 0
      %v927 = vsel %vm826, %v896, 0
      %v930 = vsel %vm826, %v897, 0
      %v933 = vsel %vm826, %v898, 0
      %v936 = vsel %vm826, %v899, 0
      %v939 = vsel %vm826, %v900, 0
      %941 = vmatpush.bf16.msra.mxu0 0
      %942 = vmatpush.bf16.msra.mxu0 0
      %943 = vmatpush.bf16.msra.mxu0 0
      %944 = vmatpush.bf16.msra.mxu0 0
      %945 = vmatpush.bf16.msra.mxu0 0
      %946 = vmatpush.bf16.msra.mxu0 0
      %947 = vmatpush.bf16.msra.mxu0 %v914
      %948 = vmatpush.bf16.msra.mxu0 %v913
      %949 = vmatmul.bf16.gmra.mxu0 %v918
      %v950 = vpop.f32.mrf.mxu0
      %v951 = vadd.f32 0.0, %v950
      %v952 = vpop.f32.mrf.mxu0
      %v953 = vadd.f32 0.0, %v952
      %954 = vmatmul.bf16.gmra.mxu0 %v921
      %v955 = vpop.f32.mrf.mxu0
      %v956 = vadd.f32 0.0, %v955
      %v957 = vpop.f32.mrf.mxu0
      %v958 = vadd.f32 0.0, %v957
      %959 = vmatmul.bf16.gmra.mxu0 %v924
      %v960 = vpop.f32.mrf.mxu0
      %v961 = vadd.f32 0.0, %v960
      %v962 = vpop.f32.mrf.mxu0
      %v963 = vadd.f32 0.0, %v962
      %964 = vmatmul.bf16.gmra.mxu0 %v927
      %v965 = vpop.f32.mrf.mxu0
      %v966 = vadd.f32 0.0, %v965
      %v967 = vpop.f32.mrf.mxu0
      %v968 = vadd.f32 0.0, %v967
      %969 = vmatmul.bf16.gmra.mxu0 %v930
      %v970 = vpop.f32.mrf.mxu0
      %v971 = vadd.f32 0.0, %v970
      %v972 = vpop.f32.mrf.mxu0
      %v973 = vadd.f32 0.0, %v972
      %974 = vmatmul.bf16.gmra.mxu0 %v933
      %v975 = vpop.f32.mrf.mxu0
      %v976 = vadd.f32 0.0, %v975
      %v977 = vpop.f32.mrf.mxu0
      %v978 = vadd.f32 0.0, %v977
      %979 = vmatmul.bf16.gmra.mxu0 %v936
      %v980 = vpop.f32.mrf.mxu0
      %v981 = vadd.f32 0.0, %v980
      %v982 = vpop.f32.mrf.mxu0
      %v983 = vadd.f32 0.0, %v982
      %984 = vmatmul.bf16.gmra.mxu0 %v939
      %v985 = vpop.f32.mrf.mxu0
      %v986 = vadd.f32 0.0, %v985
      %v987 = vpop.f32.mrf.mxu0
      %v988 = vadd.f32 0.0, %v987
      %989 = vdwg.mxu0
      %v994 = vunpack.c.l.b16 %v873
      %v995 = vunpack.c.l.b16 %v874
      %v996 = vunpack.c.l.b16 %v875
      %v997 = vunpack.c.l.b16 %v876
      %v998 = vpack.c.b16 %v995, %v994
      %v999 = vpack.c.b16 %v997, %v996
      %v1003 = vsel %vm826, %v865, 0
      %v1006 = vsel %vm826, %v866, 0
      %v1009 = vsel %vm826, %v867, 0
      %v1012 = vsel %vm826, %v868, 0
      %v1015 = vsel %vm826, %v869, 0
      %v1018 = vsel %vm826, %v870, 0
      %v1021 = vsel %vm826, %v871, 0
      %v1024 = vsel %vm826, %v872, 0
      %1026 = vmatpush.bf16.msra.mxu0 0
      %1027 = vmatpush.bf16.msra.mxu0 0
      %1028 = vmatpush.bf16.msra.mxu0 0
      %1029 = vmatpush.bf16.msra.mxu0 0
      %1030 = vmatpush.bf16.msra.mxu0 0
      %1031 = vmatpush.bf16.msra.mxu0 0
      %1032 = vmatpush.bf16.msra.mxu0 %v999
      %1033 = vmatpush.bf16.msra.mxu0 %v998
      %1034 = vmatmul.bf16.gmra.mxu0 %v1003
      %v1035 = vpop.f32.mrf.mxu0
      %v1036 = vadd.f32 %v951, %v1035
      %v1037 = vpop.f32.mrf.mxu0
      %v1038 = vadd.f32 %v953, %v1037
      %1039 = vmatmul.bf16.gmra.mxu0 %v1006
      %v1040 = vpop.f32.mrf.mxu0
      %v1041 = vadd.f32 %v956, %v1040
      %v1042 = vpop.f32.mrf.mxu0
      %v1043 = vadd.f32 %v958, %v1042
      %1044 = vmatmul.bf16.gmra.mxu0 %v1009
      %v1045 = vpop.f32.mrf.mxu0
      %v1046 = vadd.f32 %v961, %v1045
      %v1047 = vpop.f32.mrf.mxu0
      %v1048 = vadd.f32 %v963, %v1047
      %1049 = vmatmul.bf16.gmra.mxu0 %v1012
      %v1050 = vpop.f32.mrf.mxu0
      %v1051 = vadd.f32 %v966, %v1050
      %v1052 = vpop.f32.mrf.mxu0
      %v1053 = vadd.f32 %v968, %v1052
      %1054 = vmatmul.bf16.gmra.mxu0 %v1015
      %v1055 = vpop.f32.mrf.mxu0
      %v1056 = vadd.f32 %v971, %v1055
      %v1057 = vpop.f32.mrf.mxu0
      %v1058 = vadd.f32 %v973, %v1057
      %1059 = vmatmul.bf16.gmra.mxu0 %v1018
      %v1060 = vpop.f32.mrf.mxu0
      %v1061 = vadd.f32 %v976, %v1060
      %v1062 = vpop.f32.mrf.mxu0
      %v1063 = vadd.f32 %v978, %v1062
      %1064 = vmatmul.bf16.gmra.mxu0 %v1021
      %v1065 = vpop.f32.mrf.mxu0
      %v1066 = vadd.f32 %v981, %v1065
      %v1067 = vpop.f32.mrf.mxu0
      %v1068 = vadd.f32 %v983, %v1067
      %1069 = vmatmul.bf16.gmra.mxu0 %v1024
      %v1070 = vpop.f32.mrf.mxu0
      %v1071 = vadd.f32 %v986, %v1070
      %v1072 = vpop.f32.mrf.mxu0
      %v1073 = vadd.f32 %v988, %v1072
      %1074 = vdwg.mxu0
      %v1075 = vld [vmem:[%s4] sm:$0x1]
      %v1077 = vperm.slane %v1075, 0
      %v1079 = vadd.f32 %v1036, %v1077
      %v1080 = vadd.f32 %v1038, %v1077
      %v1081 = vadd.f32 %v1041, %v1077
      %v1082 = vadd.f32 %v1043, %v1077
      %v1083 = vadd.f32 %v1046, %v1077
      %v1084 = vadd.f32 %v1048, %v1077
      %v1085 = vadd.f32 %v1051, %v1077
      %v1086 = vadd.f32 %v1053, %v1077
      %v1087 = vadd.f32 %v1056, %v1077
      %v1088 = vadd.f32 %v1058, %v1077
      %v1089 = vadd.f32 %v1061, %v1077
      %v1090 = vadd.f32 %v1063, %v1077
      %v1091 = vadd.f32 %v1066, %v1077
      %v1092 = vadd.f32 %v1068, %v1077
      %v1093 = vadd.f32 %v1071, %v1077
      %v1094 = vadd.f32 %v1073, %v1077
      %vm1095 = vcmp.ge.f32.partialorder %v1079, 0.0
      %vm1096 = vcmp.ge.f32.partialorder %v1080, 0.0
      %vm1097 = vcmp.ge.f32.partialorder %v1081, 0.0
      %vm1098 = vcmp.ge.f32.partialorder %v1082, 0.0
      %vm1099 = vcmp.ge.f32.partialorder %v1083, 0.0
      %vm1100 = vcmp.ge.f32.partialorder %v1084, 0.0
      %vm1101 = vcmp.ge.f32.partialorder %v1085, 0.0
      %vm1102 = vcmp.ge.f32.partialorder %v1086, 0.0
      %vm1103 = vcmp.ge.f32.partialorder %v1087, 0.0
      %vm1104 = vcmp.ge.f32.partialorder %v1088, 0.0
      %vm1105 = vcmp.ge.f32.partialorder %v1089, 0.0
      %vm1106 = vcmp.ge.f32.partialorder %v1090, 0.0
      %vm1107 = vcmp.ge.f32.partialorder %v1091, 0.0
      %vm1108 = vcmp.ge.f32.partialorder %v1092, 0.0
      %vm1109 = vcmp.ge.f32.partialorder %v1093, 0.0
      %vm1110 = vcmp.ge.f32.partialorder %v1094, 0.0
      %v1111 = vmul.f32 %v1079, 0.1
      %v1112 = vmul.f32 %v1080, 0.1
      %v1113 = vmul.f32 %v1081, 0.1
      %v1114 = vmul.f32 %v1082, 0.1
      %v1115 = vmul.f32 %v1083, 0.1
      %v1116 = vmul.f32 %v1084, 0.1
      %v1117 = vmul.f32 %v1085, 0.1
      %v1118 = vmul.f32 %v1086, 0.1
      %v1119 = vmul.f32 %v1087, 0.1
      %v1120 = vmul.f32 %v1088, 0.1
      %v1121 = vmul.f32 %v1089, 0.1
      %v1122 = vmul.f32 %v1090, 0.1
      %v1123 = vmul.f32 %v1091, 0.1
      %v1124 = vmul.f32 %v1092, 0.1
      %v1125 = vmul.f32 %v1093, 0.1
      %v1126 = vmul.f32 %v1094, 0.1
      %v1127 = vsel %vm1095, %v1079, %v1111
      %v1128 = vsel %vm1096, %v1080, %v1112
      %v1129 = vsel %vm1097, %v1081, %v1113
      %v1130 = vsel %vm1098, %v1082, %v1114
      %v1131 = vsel %vm1099, %v1083, %v1115
      %v1132 = vsel %vm1100, %v1084, %v1116
      %v1133 = vsel %vm1101, %v1085, %v1117
      %v1134 = vsel %vm1102, %v1086, %v1118
      %v1135 = vsel %vm1103, %v1087, %v1119
      %v1136 = vsel %vm1104, %v1088, %v1120
      %v1137 = vsel %vm1105, %v1089, %v1121
      %v1138 = vsel %vm1106, %v1090, %v1122
      %v1139 = vsel %vm1107, %v1091, %v1123
      %v1140 = vsel %vm1108, %v1092, %v1124
      %v1141 = vsel %vm1109, %v1093, %v1125
      %v1142 = vsel %vm1110, %v1094, %v1126
      %v1143 = vpack.c.bf16 %v484, %v483
      %v1144 = vpack.c.bf16 %v486, %v485
      %v1145 = vpack.c.bf16 %v488, %v487
      %v1146 = vpack.c.bf16 %v490, %v489
      %v1147 = vpack.c.bf16 %v492, %v491
      %v1148 = vpack.c.bf16 %v494, %v493
      %v1149 = vpack.c.bf16 %v496, %v495
      %v1150 = vpack.c.bf16 %v498, %v497
      %v1151 = vld [vmem:[%s5] sm:$0x3]
      %v1152 = vld [vmem:[%s6] sm:$0x1]
      %v1154 = vperm.slane %v1152, 0
      %v1157 = vsel %vm512, %v1143, 0
      %v1160 = vsel %vm512, %v1144, 0
      %v1163 = vsel %vm512, %v1145, 0
      %v1166 = vsel %vm512, %v1146, 0
      %v1169 = vsel %vm512, %v1147, 0
      %v1172 = vsel %vm512, %v1148, 0
      %v1175 = vsel %vm512, %v1149, 0
      %v1178 = vsel %vm512, %v1150, 0
      %v1181 = vsel %vm614, %v1151, 0
      %1183 = vmatpush.bf16.msra.mxu0 0
      %1184 = vmatpush.bf16.msra.mxu0 0
      %1185 = vmatpush.bf16.msra.mxu0 0
      %1186 = vmatpush.bf16.msra.mxu0 0
      %1187 = vmatpush.bf16.msra.mxu0 0
      %1188 = vmatpush.bf16.msra.mxu0 0
      %1189 = vmatpush.bf16.msra.mxu0 0
      %1190 = vmatpush.bf16.msra.mxu0 %v1181
      %1191 = vmatmul.bf16.gmra.mxu0 %v1157
      %v1192 = vpop.f32.mrf.mxu0
      %v1193 = vadd.f32 %v1154, %v1192
      %v1194 = vpop.f32.mrf.mxu0
      %v1195 = vadd.f32 %v1154, %v1194
      %1196 = vmatmul.bf16.gmra.mxu0 %v1160
      %v1197 = vpop.f32.mrf.mxu0
      %v1198 = vadd.f32 %v1154, %v1197
      %v1199 = vpop.f32.mrf.mxu0
      %v1200 = vadd.f32 %v1154, %v1199
      %1201 = vmatmul.bf16.gmra.mxu0 %v1163
      %v1202 = vpop.f32.mrf.mxu0
      %v1203 = vadd.f32 %v1154, %v1202
      %v1204 = vpop.f32.mrf.mxu0
      %v1205 = vadd.f32 %v1154, %v1204
      %1206 = vmatmul.bf16.gmra.mxu0 %v1166
      %v1207 = vpop.f32.mrf.mxu0
      %v1208 = vadd.f32 %v1154, %v1207
      %v1209 = vpop.f32.mrf.mxu0
      %v1210 = vadd.f32 %v1154, %v1209
      %1211 = vmatmul.bf16.gmra.mxu0 %v1169
      %v1212 = vpop.f32.mrf.mxu0
      %v1213 = vadd.f32 %v1154, %v1212
      %v1214 = vpop.f32.mrf.mxu0
      %v1215 = vadd.f32 %v1154, %v1214
      %1216 = vmatmul.bf16.gmra.mxu0 %v1172
      %v1217 = vpop.f32.mrf.mxu0
      %v1218 = vadd.f32 %v1154, %v1217
      %v1219 = vpop.f32.mrf.mxu0
      %v1220 = vadd.f32 %v1154, %v1219
      %1221 = vmatmul.bf16.gmra.mxu0 %v1175
      %v1222 = vpop.f32.mrf.mxu0
      %v1223 = vadd.f32 %v1154, %v1222
      %v1224 = vpop.f32.mrf.mxu0
      %v1225 = vadd.f32 %v1154, %v1224
      %1226 = vmatmul.bf16.gmra.mxu0 %v1178
      %v1227 = vpop.f32.mrf.mxu0
      %v1228 = vadd.f32 %v1154, %v1227
      %v1229 = vpop.f32.mrf.mxu0
      %v1230 = vadd.f32 %v1154, %v1229
      %1231 = vdwg.mxu0
      %v1232 = vadd.f32 %v1127, %v1193
      %v1233 = vadd.f32 %v1128, %v1195
      %v1234 = vadd.f32 %v1129, %v1198
      %v1235 = vadd.f32 %v1130, %v1200
      %v1236 = vadd.f32 %v1131, %v1203
      %v1237 = vadd.f32 %v1132, %v1205
      %v1238 = vadd.f32 %v1133, %v1208
      %v1239 = vadd.f32 %v1134, %v1210
      %v1240 = vadd.f32 %v1135, %v1213
      %v1241 = vadd.f32 %v1136, %v1215
      %v1242 = vadd.f32 %v1137, %v1218
      %v1243 = vadd.f32 %v1138, %v1220
      %v1244 = vadd.f32 %v1139, %v1223
      %v1245 = vadd.f32 %v1140, %v1225
      %v1246 = vadd.f32 %v1141, %v1228
      %v1247 = vadd.f32 %v1142, %v1230
      %vm1248 = vcmp.ge.f32.partialorder %v1232, 0.0
      %vm1249 = vcmp.ge.f32.partialorder %v1233, 0.0
      %vm1250 = vcmp.ge.f32.partialorder %v1234, 0.0
      %vm1251 = vcmp.ge.f32.partialorder %v1235, 0.0
      %vm1252 = vcmp.ge.f32.partialorder %v1236, 0.0
      %vm1253 = vcmp.ge.f32.partialorder %v1237, 0.0
      %vm1254 = vcmp.ge.f32.partialorder %v1238, 0.0
      %vm1255 = vcmp.ge.f32.partialorder %v1239, 0.0
      %vm1256 = vcmp.ge.f32.partialorder %v1240, 0.0
      %vm1257 = vcmp.ge.f32.partialorder %v1241, 0.0
      %vm1258 = vcmp.ge.f32.partialorder %v1242, 0.0
      %vm1259 = vcmp.ge.f32.partialorder %v1243, 0.0
      %vm1260 = vcmp.ge.f32.partialorder %v1244, 0.0
      %vm1261 = vcmp.ge.f32.partialorder %v1245, 0.0
      %vm1262 = vcmp.ge.f32.partialorder %v1246, 0.0
      %vm1263 = vcmp.ge.f32.partialorder %v1247, 0.0
      %v1264 = vmul.f32 %v1232, 0.1
      %v1265 = vmul.f32 %v1233, 0.1
      %v1266 = vmul.f32 %v1234, 0.1
      %v1267 = vmul.f32 %v1235, 0.1
      %v1268 = vmul.f32 %v1236, 0.1
      %v1269 = vmul.f32 %v1237, 0.1
      %v1270 = vmul.f32 %v1238, 0.1
      %v1271 = vmul.f32 %v1239, 0.1
      %v1272 = vmul.f32 %v1240, 0.1
      %v1273 = vmul.f32 %v1241, 0.1
      %v1274 = vmul.f32 %v1242, 0.1
      %v1275 = vmul.f32 %v1243, 0.1
      %v1276 = vmul.f32 %v1244, 0.1
      %v1277 = vmul.f32 %v1245, 0.1
      %v1278 = vmul.f32 %v1246, 0.1
      %v1279 = vmul.f32 %v1247, 0.1
      %v1280 = vsel %vm1248, %v1232, %v1264
      %v1281 = vsel %vm1249, %v1233, %v1265
      %v1282 = vsel %vm1250, %v1234, %v1266
      %v1283 = vsel %vm1251, %v1235, %v1267
      %v1284 = vsel %vm1252, %v1236, %v1268
      %v1285 = vsel %vm1253, %v1237, %v1269
      %v1286 = vsel %vm1254, %v1238, %v1270
      %v1287 = vsel %vm1255, %v1239, %v1271
      %v1288 = vsel %vm1256, %v1240, %v1272
      %v1289 = vsel %vm1257, %v1241, %v1273
      %v1290 = vsel %vm1258, %v1242, %v1274
      %v1291 = vsel %vm1259, %v1243, %v1275
      %v1292 = vsel %vm1260, %v1244, %v1276
      %v1293 = vsel %vm1261, %v1245, %v1277
      %v1294 = vsel %vm1262, %v1246, %v1278
      %v1295 = vsel %vm1263, %v1247, %v1279
      // Predicated region
      $region85: #{tpu_custom_call.1} parent=71 // pred_check
        %p1296 = pneg %p499
      $region86: #{tpu_custom_call.1} parent=71 // pred_check_branch
        %1298 = sbr.rel (%p1296) target = $region88
      $region87: #{tpu_custom_call.1} parent=71 // pred_region
        %vm1299 = vcmask 257024
        %1300 = vst.msk [vmem:[#allocation3] sm:$0xf] %vm1299, 0.0
      $region88: #{tpu_custom_call.1} parent=71 // pred_fallthru
        _
      // Predicated region
      $region89: #{tpu_custom_call.1} parent=71 // pred_check
        %p1301 = pneg %p505
      $region90: #{tpu_custom_call.1} parent=71 // pred_check_branch
        %1303 = sbr.rel (%p1301) target = $region92
      $region91: #{tpu_custom_call.1} parent=71 // pred_region
        %v1304 = vld [vmem:[#allocation3 + $0x80] sm:$0xf]
        %vm1305 = vcmask 257024
        %1306 = vst.msk [vmem:[#allocation3] sm:$0xf] %vm1305, %v1304
      $region92: #{tpu_custom_call.1} parent=71 // pred_fallthru
        _
      %1307 = vst.msk [vmem:[#allocation3 + $0x4] sm:$0xff] %vm826, %v1280
      %1308 = vst.msk [vmem:[#allocation3 + $0xc] sm:$0xff] %vm826, %v1281
      %1309 = vst.msk [vmem:[#allocation3 + $0x14] sm:$0xff] %vm826, %v1282
      %1310 = vst.msk [vmem:[#allocation3 + $0x1c] sm:$0xff] %vm826, %v1283
      %1311 = vst.msk [vmem:[#allocation3 + $0x24] sm:$0xff] %vm826, %v1284
      %1312 = vst.msk [vmem:[#allocation3 + $0x2c] sm:$0xff] %vm826, %v1285
      %1313 = vst.msk [vmem:[#allocation3 + $0x34] sm:$0xff] %vm826, %v1286
      %1314 = vst.msk [vmem:[#allocation3 + $0x3c] sm:$0xff] %vm826, %v1287
      %1315 = vst.msk [vmem:[#allocation3 + $0x44] sm:$0xff] %vm826, %v1288
      %1316 = vst.msk [vmem:[#allocation3 + $0x4c] sm:$0xff] %vm826, %v1289
      %1317 = vst.msk [vmem:[#allocation3 + $0x54] sm:$0xff] %vm826, %v1290
      %1318 = vst.msk [vmem:[#allocation3 + $0x5c] sm:$0xff] %vm826, %v1291
      %1319 = vst.msk [vmem:[#allocation3 + $0x64] sm:$0xff] %vm826, %v1292
      %1320 = vst.msk [vmem:[#allocation3 + $0x6c] sm:$0xff] %vm826, %v1293
      %1321 = vst.msk [vmem:[#allocation3 + $0x74] sm:$0xff] %vm826, %v1294
      %1322 = vst.msk [vmem:[#allocation3 + $0x7c] sm:$0xff] %vm826, %v1295
      %v1323 = vld [vmem:[#allocation3] sm:$0xff]
      %v1324 = vld [vmem:[#allocation3 + $0x8] sm:$0xff]
      %v1325 = vld [vmem:[#allocation3 + $0x10] sm:$0xff]
      %v1326 = vld [vmem:[#allocation3 + $0x18] sm:$0xff]
      %v1327 = vld [vmem:[#allocation3 + $0x20] sm:$0xff]
      %v1328 = vld [vmem:[#allocation3 + $0x28] sm:$0xff]
      %v1329 = vld [vmem:[#allocation3 + $0x30] sm:$0xff]
      %v1330 = vld [vmem:[#allocation3 + $0x38] sm:$0xff]
      %v1331 = vld [vmem:[#allocation3 + $0x40] sm:$0xff]
      %v1332 = vld [vmem:[#allocation3 + $0x48] sm:$0xff]
      %v1333 = vld [vmem:[#allocation3 + $0x50] sm:$0xff]
      %v1334 = vld [vmem:[#allocation3 + $0x58] sm:$0xff]
      %v1335 = vld [vmem:[#allocation3 + $0x60] sm:$0xff]
      %v1336 = vld [vmem:[#allocation3 + $0x68] sm:$0xff]
      %v1337 = vld [vmem:[#allocation3 + $0x70] sm:$0xff]
      %v1338 = vld [vmem:[#allocation3 + $0x78] sm:$0xff]
      %v1339 = vld [vmem:[#allocation3 + $0x80] sm:$0x3]
      %v1340 = vpack.c.bf16 %v1324, %v1323
      %v1341 = vpack.c.bf16 %v1326, %v1325
      %v1342 = vpack.c.bf16 %v1328, %v1327
      %v1343 = vpack.c.bf16 %v1330, %v1329
      %v1344 = vpack.c.bf16 %v1332, %v1331
      %v1345 = vpack.c.bf16 %v1334, %v1333
      %v1346 = vpack.c.bf16 %v1336, %v1335
      %v1347 = vpack.c.bf16 %v1338, %v1337
      %v1348 = vpack.c.bf16 %v1339, %v1339
      %v1349 = vld [vmem:[%s7] sm:$0xf]
      %v1350 = vld [vmem:[%s7 + $0x4] sm:$0xf]
      %v1351 = vld [vmem:[%s7 + $0x8] sm:$0xf]
      %v1352 = vld [vmem:[%s7 + $0xc] sm:$0xf]
      %v1353 = vld [vmem:[#allocation3 + $0x2] sm:$0xff]
      %v1354 = vld [vmem:[#allocation3 + $0xa] sm:$0xff]
      %v1355 = vld [vmem:[#allocation3 + $0x12] sm:$0xff]
      %v1356 = vld [vmem:[#allocation3 + $0x1a] sm:$0xff]
      %v1357 = vld [vmem:[#allocation3 + $0x22] sm:$0xff]
      %v1358 = vld [vmem:[#allocation3 + $0x2a] sm:$0xff]
      %v1359 = vld [vmem:[#allocation3 + $0x32] sm:$0xff]
      %v1360 = vld [vmem:[#allocation3 + $0x3a] sm:$0xff]
      %v1361 = vld [vmem:[#allocation3 + $0x42] sm:$0xff]
      %v1362 = vld [vmem:[#allocation3 + $0x4a] sm:$0xff]
      %v1363 = vld [vmem:[#allocation3 + $0x52] sm:$0xff]
      %v1364 = vld [vmem:[#allocation3 + $0x5a] sm:$0xff]
      %v1365 = vld [vmem:[#allocation3 + $0x62] sm:$0xff]
      %v1366 = vld [vmem:[#allocation3 + $0x6a] sm:$0xff]
      %v1367 = vld [vmem:[#allocation3 + $0x72] sm:$0xff]
      %v1368 = vld [vmem:[#allocation3 + $0x7a] sm:$0xff]
      %v1369 = vld [vmem:[#allocation3 + $0x82] sm:$0x3]
      %v1370 = vpack.c.bf16 %v1354, %v1353
      %v1371 = vpack.c.bf16 %v1356, %v1355
      %v1372 = vpack.c.bf16 %v1358, %v1357
      %v1373 = vpack.c.bf16 %v1360, %v1359
      %v1374 = vpack.c.bf16 %v1362, %v1361
      %v1375 = vpack.c.bf16 %v1364, %v1363
      %v1376 = vpack.c.bf16 %v1366, %v1365
      %v1377 = vpack.c.bf16 %v1368, %v1367
      %v1378 = vpack.c.bf16 %v1369, %v1369
      %v1379 = vld [vmem:[%s7 + $0x10] sm:$0xf]
      %v1380 = vld [vmem:[%s7 + $0x14] sm:$0xf]
      %v1381 = vld [vmem:[%s7 + $0x18] sm:$0xf]
      %v1382 = vld [vmem:[%s7 + $0x1c] sm:$0xf]
      %v1387 = vunpack.c.l.b16 %v1379
      %v1388 = vunpack.c.l.b16 %v1380
      %v1389 = vunpack.c.l.b16 %v1381
      %v1390 = vunpack.c.l.b16 %v1382
      %v1391 = vpack.c.b16 %v1388, %v1387
      %v1392 = vpack.c.b16 %v1390, %v1389
      %v1396 = vsel %vm826, %v1370, 0
      %v1399 = vsel %vm826, %v1371, 0
      %v1402 = vsel %vm826, %v1372, 0
      %v1405 = vsel %vm826, %v1373, 0
      %v1408 = vsel %vm826, %v1374, 0
      %v1411 = vsel %vm826, %v1375, 0
      %v1414 = vsel %vm826, %v1376, 0
      %v1417 = vsel %vm826, %v1377, 0
      %v1420 = vsel %vm826, %v1378, 0
      %1422 = vmatpush.bf16.msra.mxu0 0
      %1423 = vmatpush.bf16.msra.mxu0 0
      %1424 = vmatpush.bf16.msra.mxu0 0
      %1425 = vmatpush.bf16.msra.mxu0 0
      %1426 = vmatpush.bf16.msra.mxu0 0
      %1427 = vmatpush.bf16.msra.mxu0 0
      %1428 = vmatpush.bf16.msra.mxu0 %v1392
      %1429 = vmatpush.bf16.msra.mxu0 %v1391
      %1430 = vmatmul.bf16.gmra.mxu0 %v1396
      %v1431 = vpop.f32.mrf.mxu0
      %v1432 = vadd.f32 0.0, %v1431
      %v1433 = vpop.f32.mrf.mxu0
      %v1434 = vadd.f32 0.0, %v1433
      %1435 = vmatmul.bf16.gmra.mxu0 %v1399
      %v1436 = vpop.f32.mrf.mxu0
      %v1437 = vadd.f32 0.0, %v1436
      %v1438 = vpop.f32.mrf.mxu0
      %v1439 = vadd.f32 0.0, %v1438
      %1440 = vmatmul.bf16.gmra.mxu0 %v1402
      %v1441 = vpop.f32.mrf.mxu0
      %v1442 = vadd.f32 0.0, %v1441
      %v1443 = vpop.f32.mrf.mxu0
      %v1444 = vadd.f32 0.0, %v1443
      %1445 = vmatmul.bf16.gmra.mxu0 %v1405
      %v1446 = vpop.f32.mrf.mxu0
      %v1447 = vadd.f32 0.0, %v1446
      %v1448 = vpop.f32.mrf.mxu0
      %v1449 = vadd.f32 0.0, %v1448
      %1450 = vmatmul.bf16.gmra.mxu0 %v1408
      %v1451 = vpop.f32.mrf.mxu0
      %v1452 = vadd.f32 0.0, %v1451
      %v1453 = vpop.f32.mrf.mxu0
      %v1454 = vadd.f32 0.0, %v1453
      %1455 = vmatmul.bf16.gmra.mxu0 %v1411
      %v1456 = vpop.f32.mrf.mxu0
      %v1457 = vadd.f32 0.0, %v1456
      %v1458 = vpop.f32.mrf.mxu0
      %v1459 = vadd.f32 0.0, %v1458
      %1460 = vmatmul.bf16.gmra.mxu0 %v1414
      %v1461 = vpop.f32.mrf.mxu0
      %v1462 = vadd.f32 0.0, %v1461
      %v1463 = vpop.f32.mrf.mxu0
      %v1464 = vadd.f32 0.0, %v1463
      %1465 = vmatmul.bf16.gmra.mxu0 %v1417
      %v1466 = vpop.f32.mrf.mxu0
      %v1467 = vadd.f32 0.0, %v1466
      %v1468 = vpop.f32.mrf.mxu0
      %v1469 = vadd.f32 0.0, %v1468
      %1470 = vmatmul.bf16.gmra.mxu0 %v1420
      %v1471 = vpop.f32.mrf.mxu0
      %v1472 = vadd.f32 0.0, %v1471
      %v1473 = vpop.f32.mrf.mxu0
      %1474 = vdwg.mxu0
      %v1479 = vunpack.c.l.b16 %v1349
      %v1480 = vunpack.c.l.b16 %v1350
      %v1481 = vunpack.c.l.b16 %v1351
      %v1482 = vunpack.c.l.b16 %v1352
      %v1483 = vpack.c.b16 %v1480, %v1479
      %v1484 = vpack.c.b16 %v1482, %v1481
      %v1488 = vsel %vm826, %v1340, 0
      %v1491 = vsel %vm826, %v1341, 0
      %v1494 = vsel %vm826, %v1342, 0
      %v1497 = vsel %vm826, %v1343, 0
      %v1500 = vsel %vm826, %v1344, 0
      %v1503 = vsel %vm826, %v1345, 0
      %v1506 = vsel %vm826, %v1346, 0
      %v1509 = vsel %vm826, %v1347, 0
      %v1512 = vsel %vm826, %v1348, 0
      %1514 = vmatpush.bf16.msra.mxu0 0
      %1515 = vmatpush.bf16.msra.mxu0 0
      %1516 = vmatpush.bf16.msra.mxu0 0
      %1517 = vmatpush.bf16.msra.mxu0 0
      %1518 = vmatpush.bf16.msra.mxu0 0
      %1519 = vmatpush.bf16.msra.mxu0 0
      %1520 = vmatpush.bf16.msra.mxu0 %v1484
      %1521 = vmatpush.bf16.msra.mxu0 %v1483
      %1522 = vmatmul.bf16.gmra.mxu0 %v1488
      %v1523 = vpop.f32.mrf.mxu0
      %v1524 = vadd.f32 %v1432, %v1523
      %v1525 = vpop.f32.mrf.mxu0
      %v1526 = vadd.f32 %v1434, %v1525
      %1527 = vmatmul.bf16.gmra.mxu0 %v1491
      %v1528 = vpop.f32.mrf.mxu0
      %v1529 = vadd.f32 %v1437, %v1528
      %v1530 = vpop.f32.mrf.mxu0
      %v1531 = vadd.f32 %v1439, %v1530
      %1532 = vmatmul.bf16.gmra.mxu0 %v1494
      %v1533 = vpop.f32.mrf.mxu0
      %v1534 = vadd.f32 %v1442, %v1533
      %v1535 = vpop.f32.mrf.mxu0
      %v1536 = vadd.f32 %v1444, %v1535
      %1537 = vmatmul.bf16.gmra.mxu0 %v1497
      %v1538 = vpop.f32.mrf.mxu0
      %v1539 = vadd.f32 %v1447, %v1538
      %v1540 = vpop.f32.mrf.mxu0
      %v1541 = vadd.f32 %v1449, %v1540
      %1542 = vmatmul.bf16.gmra.mxu0 %v1500
      %v1543 = vpop.f32.mrf.mxu0
      %v1544 = vadd.f32 %v1452, %v1543
      %v1545 = vpop.f32.mrf.mxu0
      %v1546 = vadd.f32 %v1454, %v1545
      %1547 = vmatmul.bf16.gmra.mxu0 %v1503
      %v1548 = vpop.f32.mrf.mxu0
      %v1549 = vadd.f32 %v1457, %v1548
      %v1550 = vpop.f32.mrf.mxu0
      %v1551 = vadd.f32 %v1459, %v1550
      %1552 = vmatmul.bf16.gmra.mxu0 %v1506
      %v1553 = vpop.f32.mrf.mxu0
      %v1554 = vadd.f32 %v1462, %v1553
      %v1555 = vpop.f32.mrf.mxu0
      %v1556 = vadd.f32 %v1464, %v1555
      %1557 = vmatmul.bf16.gmra.mxu0 %v1509
      %v1558 = vpop.f32.mrf.mxu0
      %v1559 = vadd.f32 %v1467, %v1558
      %v1560 = vpop.f32.mrf.mxu0
      %v1561 = vadd.f32 %v1469, %v1560
      %1562 = vmatmul.bf16.gmra.mxu0 %v1512
      %v1563 = vpop.f32.mrf.mxu0
      %v1564 = vadd.f32 %v1472, %v1563
      %v1565 = vpop.f32.mrf.mxu0
      %1566 = vdwg.mxu0
      %v1567 = vld [vmem:[%s8] sm:$0x1]
      %v1569 = vperm.slane %v1567, 0
      %v1571 = vadd.f32 %v1524, %v1569
      %v1572 = vadd.f32 %v1526, %v1569
      %v1573 = vadd.f32 %v1529, %v1569
      %v1574 = vadd.f32 %v1531, %v1569
      %v1575 = vadd.f32 %v1534, %v1569
      %v1576 = vadd.f32 %v1536, %v1569
      %v1577 = vadd.f32 %v1539, %v1569
      %v1578 = vadd.f32 %v1541, %v1569
      %v1579 = vadd.f32 %v1544, %v1569
      %v1580 = vadd.f32 %v1546, %v1569
      %v1581 = vadd.f32 %v1549, %v1569
      %v1582 = vadd.f32 %v1551, %v1569
      %v1583 = vadd.f32 %v1554, %v1569
      %v1584 = vadd.f32 %v1556, %v1569
      %v1585 = vadd.f32 %v1559, %v1569
      %v1586 = vadd.f32 %v1561, %v1569
      %v1587 = vadd.f32 %v1564, %v1569
      %vm1588 = vcmp.ge.f32.partialorder %v1571, 0.0
      %vm1589 = vcmp.ge.f32.partialorder %v1572, 0.0
      %vm1590 = vcmp.ge.f32.partialorder %v1573, 0.0
      %vm1591 = vcmp.ge.f32.partialorder %v1574, 0.0
      %vm1592 = vcmp.ge.f32.partialorder %v1575, 0.0
      %vm1593 = vcmp.ge.f32.partialorder %v1576, 0.0
      %vm1594 = vcmp.ge.f32.partialorder %v1577, 0.0
      %vm1595 = vcmp.ge.f32.partialorder %v1578, 0.0
      %vm1596 = vcmp.ge.f32.partialorder %v1579, 0.0
      %vm1597 = vcmp.ge.f32.partialorder %v1580, 0.0
      %vm1598 = vcmp.ge.f32.partialorder %v1581, 0.0
      %vm1599 = vcmp.ge.f32.partialorder %v1582, 0.0
      %vm1600 = vcmp.ge.f32.partialorder %v1583, 0.0
      %vm1601 = vcmp.ge.f32.partialorder %v1584, 0.0
      %vm1602 = vcmp.ge.f32.partialorder %v1585, 0.0
      %vm1603 = vcmp.ge.f32.partialorder %v1586, 0.0
      %vm1604 = vcmp.ge.f32.partialorder %v1587, 0.0
      %v1605 = vmul.f32 %v1571, 0.1
      %v1606 = vmul.f32 %v1572, 0.1
      %v1607 = vmul.f32 %v1573, 0.1
      %v1608 = vmul.f32 %v1574, 0.1
      %v1609 = vmul.f32 %v1575, 0.1
      %v1610 = vmul.f32 %v1576, 0.1
      %v1611 = vmul.f32 %v1577, 0.1
      %v1612 = vmul.f32 %v1578, 0.1
      %v1613 = vmul.f32 %v1579, 0.1
      %v1614 = vmul.f32 %v1580, 0.1
      %v1615 = vmul.f32 %v1581, 0.1
      %v1616 = vmul.f32 %v1582, 0.1
      %v1617 = vmul.f32 %v1583, 0.1
      %v1618 = vmul.f32 %v1584, 0.1
      %v1619 = vmul.f32 %v1585, 0.1
      %v1620 = vmul.f32 %v1586, 0.1
      %v1621 = vmul.f32 %v1587, 0.1
      %v1622 = vsel %vm1588, %v1571, %v1605
      %v1623 = vsel %vm1589, %v1572, %v1606
      %v1624 = vsel %vm1590, %v1573, %v1607
      %v1625 = vsel %vm1591, %v1574, %v1608
      %v1626 = vsel %vm1592, %v1575, %v1609
      %v1627 = vsel %vm1593, %v1576, %v1610
      %v1628 = vsel %vm1594, %v1577, %v1611
      %v1629 = vsel %vm1595, %v1578, %v1612
      %v1630 = vsel %vm1596, %v1579, %v1613
      %v1631 = vsel %vm1597, %v1580, %v1614
      %v1632 = vsel %vm1598, %v1581, %v1615
      %v1633 = vsel %vm1599, %v1582, %v1616
      %v1634 = vsel %vm1600, %v1583, %v1617
      %v1635 = vsel %vm1601, %v1584, %v1618
      %v1636 = vsel %vm1602, %v1585, %v1619
      %v1637 = vsel %vm1603, %v1586, %v1620
      %v1638 = vsel %vm1604, %v1587, %v1621
      %1639 = vst.msk [vmem:[#allocation4] sm:$0xff] %vm826, %v1622
      %1640 = vst.msk [vmem:[#allocation4 + $0x8] sm:$0xff] %vm826, %v1623
      %1641 = vst.msk [vmem:[#allocation4 + $0x10] sm:$0xff] %vm826, %v1624
      %1642 = vst.msk [vmem:[#allocation4 + $0x18] sm:$0xff] %vm826, %v1625
      %1643 = vst.msk [vmem:[#allocation4 + $0x20] sm:$0xff] %vm826, %v1626
      %1644 = vst.msk [vmem:[#allocation4 + $0x28] sm:$0xff] %vm826, %v1627
      %1645 = vst.msk [vmem:[#allocation4 + $0x30] sm:$0xff] %vm826, %v1628
      %1646 = vst.msk [vmem:[#allocation4 + $0x38] sm:$0xff] %vm826, %v1629
      %1647 = vst.msk [vmem:[#allocation4 + $0x40] sm:$0xff] %vm826, %v1630
      %1648 = vst.msk [vmem:[#allocation4 + $0x48] sm:$0xff] %vm826, %v1631
      %1649 = vst.msk [vmem:[#allocation4 + $0x50] sm:$0xff] %vm826, %v1632
      %1650 = vst.msk [vmem:[#allocation4 + $0x58] sm:$0xff] %vm826, %v1633
      %1651 = vst.msk [vmem:[#allocation4 + $0x60] sm:$0xff] %vm826, %v1634
      %1652 = vst.msk [vmem:[#allocation4 + $0x68] sm:$0xff] %vm826, %v1635
      %1653 = vst.msk [vmem:[#allocation4 + $0x70] sm:$0xff] %vm826, %v1636
      %1654 = vst.msk [vmem:[#allocation4 + $0x78] sm:$0xff] %vm826, %v1637
      %vm1655 = vcmask 254976
      %1656 = vst.msk [vmem:[#allocation4 + $0x80] sm:$0x3] %vm1655, %v1638
      // Predicated region
      $region93: #{tpu_custom_call.1} parent=71 // pred_check
        %p1657 = pneg %p499
      $region94: #{tpu_custom_call.1} parent=71 // pred_check_branch
        %1659 = sbr.rel (%p1657) target = $region96
      $region95: #{tpu_custom_call.1} parent=71 // pred_region
        %1660 = vst.msk [vmem:[#allocation4] sm:$0x3] %vm1655, 0.0
      $region96: #{tpu_custom_call.1} parent=71 // pred_fallthru
        _
      %v1661 = vld [vmem:[#allocation4] sm:$0xff]
      %v1662 = vld [vmem:[#allocation4 + $0x8] sm:$0xff]
      %v1663 = vld [vmem:[#allocation4 + $0x10] sm:$0xff]
      %v1664 = vld [vmem:[#allocation4 + $0x18] sm:$0xff]
      %v1665 = vld [vmem:[#allocation4 + $0x20] sm:$0xff]
      %v1666 = vld [vmem:[#allocation4 + $0x28] sm:$0xff]
      %v1667 = vld [vmem:[#allocation4 + $0x30] sm:$0xff]
      %v1668 = vld [vmem:[#allocation4 + $0x38] sm:$0xff]
      %v1669 = vld [vmem:[#allocation4 + $0x40] sm:$0xff]
      %v1670 = vld [vmem:[#allocation4 + $0x48] sm:$0xff]
      %v1671 = vld [vmem:[#allocation4 + $0x50] sm:$0xff]
      %v1672 = vld [vmem:[#allocation4 + $0x58] sm:$0xff]
      %v1673 = vld [vmem:[#allocation4 + $0x60] sm:$0xff]
      %v1674 = vld [vmem:[#allocation4 + $0x68] sm:$0xff]
      %v1675 = vld [vmem:[#allocation4 + $0x70] sm:$0xff]
      %v1676 = vld [vmem:[#allocation4 + $0x78] sm:$0xff]
      %v1677 = vpack.c.bf16 %v1662, %v1661
      %v1678 = vpack.c.bf16 %v1664, %v1663
      %v1679 = vpack.c.bf16 %v1666, %v1665
      %v1680 = vpack.c.bf16 %v1668, %v1667
      %v1681 = vpack.c.bf16 %v1670, %v1669
      %v1682 = vpack.c.bf16 %v1672, %v1671
      %v1683 = vpack.c.bf16 %v1674, %v1673
      %v1684 = vpack.c.bf16 %v1676, %v1675
      %v1685 = vld [vmem:[%s9] sm:$0xf]
      %v1686 = vld [vmem:[%s9 + $0x4] sm:$0xf]
      %v1687 = vld [vmem:[%s9 + $0x8] sm:$0xf]
      %v1688 = vld [vmem:[%s9 + $0xc] sm:$0xf]
      %v1689 = vld [vmem:[#allocation4 + $0x2] sm:$0xff]
      %v1690 = vld [vmem:[#allocation4 + $0xa] sm:$0xff]
      %v1691 = vld [vmem:[#allocation4 + $0x12] sm:$0xff]
      %v1692 = vld [vmem:[#allocation4 + $0x1a] sm:$0xff]
      %v1693 = vld [vmem:[#allocation4 + $0x22] sm:$0xff]
      %v1694 = vld [vmem:[#allocation4 + $0x2a] sm:$0xff]
      %v1695 = vld [vmem:[#allocation4 + $0x32] sm:$0xff]
      %v1696 = vld [vmem:[#allocation4 + $0x3a] sm:$0xff]
      %v1697 = vld [vmem:[#allocation4 + $0x42] sm:$0xff]
      %v1698 = vld [vmem:[#allocation4 + $0x4a] sm:$0xff]
      %v1699 = vld [vmem:[#allocation4 + $0x52] sm:$0xff]
      %v1700 = vld [vmem:[#allocation4 + $0x5a] sm:$0xff]
      %v1701 = vld [vmem:[#allocation4 + $0x62] sm:$0xff]
      %v1702 = vld [vmem:[#allocation4 + $0x6a] sm:$0xff]
      %v1703 = vld [vmem:[#allocation4 + $0x72] sm:$0xff]
      %v1704 = vld [vmem:[#allocation4 + $0x7a] sm:$0xff]
      %v1705 = vpack.c.bf16 %v1690, %v1689
      %v1706 = vpack.c.bf16 %v1692, %v1691
      %v1707 = vpack.c.bf16 %v1694, %v1693
      %v1708 = vpack.c.bf16 %v1696, %v1695
      %v1709 = vpack.c.bf16 %v1698, %v1697
      %v1710 = vpack.c.bf16 %v1700, %v1699
      %v1711 = vpack.c.bf16 %v1702, %v1701
      %v1712 = vpack.c.bf16 %v1704, %v1703
      %v1713 = vld [vmem:[%s9 + $0x10] sm:$0xf]
      %v1714 = vld [vmem:[%s9 + $0x14] sm:$0xf]
      %v1715 = vld [vmem:[%s9 + $0x18] sm:$0xf]
      %v1716 = vld [vmem:[%s9 + $0x1c] sm:$0xf]
      %v1721 = vunpack.c.l.b16 %v1713
      %v1722 = vunpack.c.l.b16 %v1714
      %v1723 = vunpack.c.l.b16 %v1715
      %v1724 = vunpack.c.l.b16 %v1716
      %v1725 = vpack.c.b16 %v1722, %v1721
      %v1726 = vpack.c.b16 %v1724, %v1723
      %v1730 = vsel %vm826, %v1705, 0
      %v1733 = vsel %vm826, %v1706, 0
      %v1736 = vsel %vm826, %v1707, 0
      %v1739 = vsel %vm826, %v1708, 0
      %v1742 = vsel %vm826, %v1709, 0
      %v1745 = vsel %vm826, %v1710, 0
      %v1748 = vsel %vm826, %v1711, 0
      %v1751 = vsel %vm826, %v1712, 0
      %1753 = vmatpush.bf16.msra.mxu0 0
      %1754 = vmatpush.bf16.msra.mxu0 0
      %1755 = vmatpush.bf16.msra.mxu0 0
      %1756 = vmatpush.bf16.msra.mxu0 0
      %1757 = vmatpush.bf16.msra.mxu0 0
      %1758 = vmatpush.bf16.msra.mxu0 0
      %1759 = vmatpush.bf16.msra.mxu0 %v1726
      %1760 = vmatpush.bf16.msra.mxu0 %v1725
      %1761 = vmatmul.bf16.gmra.mxu0 %v1730
      %v1762 = vpop.f32.mrf.mxu0
      %v1763 = vadd.f32 0.0, %v1762
      %v1764 = vpop.f32.mrf.mxu0
      %v1765 = vadd.f32 0.0, %v1764
      %1766 = vmatmul.bf16.gmra.mxu0 %v1733
      %v1767 = vpop.f32.mrf.mxu0
      %v1768 = vadd.f32 0.0, %v1767
      %v1769 = vpop.f32.mrf.mxu0
      %v1770 = vadd.f32 0.0, %v1769
      %1771 = vmatmul.bf16.gmra.mxu0 %v1736
      %v1772 = vpop.f32.mrf.mxu0
      %v1773 = vadd.f32 0.0, %v1772
      %v1774 = vpop.f32.mrf.mxu0
      %v1775 = vadd.f32 0.0, %v1774
      %1776 = vmatmul.bf16.gmra.mxu0 %v1739
      %v1777 = vpop.f32.mrf.mxu0
      %v1778 = vadd.f32 0.0, %v1777
      %v1779 = vpop.f32.mrf.mxu0
      %v1780 = vadd.f32 0.0, %v1779
      %1781 = vmatmul.bf16.gmra.mxu0 %v1742
      %v1782 = vpop.f32.mrf.mxu0
      %v1783 = vadd.f32 0.0, %v1782
      %v1784 = vpop.f32.mrf.mxu0
      %v1785 = vadd.f32 0.0, %v1784
      %1786 = vmatmul.bf16.gmra.mxu0 %v1745
      %v1787 = vpop.f32.mrf.mxu0
      %v1788 = vadd.f32 0.0, %v1787
      %v1789 = vpop.f32.mrf.mxu0
      %v1790 = vadd.f32 0.0, %v1789
      %1791 = vmatmul.bf16.gmra.mxu0 %v1748
      %v1792 = vpop.f32.mrf.mxu0
      %v1793 = vadd.f32 0.0, %v1792
      %v1794 = vpop.f32.mrf.mxu0
      %v1795 = vadd.f32 0.0, %v1794
      %1796 = vmatmul.bf16.gmra.mxu0 %v1751
      %v1797 = vpop.f32.mrf.mxu0
      %v1798 = vadd.f32 0.0, %v1797
      %v1799 = vpop.f32.mrf.mxu0
      %v1800 = vadd.f32 0.0, %v1799
      %1801 = vdwg.mxu0
      %v1806 = vunpack.c.l.b16 %v1685
      %v1807 = vunpack.c.l.b16 %v1686
      %v1808 = vunpack.c.l.b16 %v1687
      %v1809 = vunpack.c.l.b16 %v1688
      %v1810 = vpack.c.b16 %v1807, %v1806
      %v1811 = vpack.c.b16 %v1809, %v1808
      %v1815 = vsel %vm826, %v1677, 0
      %v1818 = vsel %vm826, %v1678, 0
      %v1821 = vsel %vm826, %v1679, 0
      %v1824 = vsel %vm826, %v1680, 0
      %v1827 = vsel %vm826, %v1681, 0
      %v1830 = vsel %vm826, %v1682, 0
      %v1833 = vsel %vm826, %v1683, 0
      %v1836 = vsel %vm826, %v1684, 0
      %1838 = vmatpush.bf16.msra.mxu0 0
      %1839 = vmatpush.bf16.msra.mxu0 0
      %1840 = vmatpush.bf16.msra.mxu0 0
      %1841 = vmatpush.bf16.msra.mxu0 0
      %1842 = vmatpush.bf16.msra.mxu0 0
      %1843 = vmatpush.bf16.msra.mxu0 0
      %1844 = vmatpush.bf16.msra.mxu0 %v1811
      %1845 = vmatpush.bf16.msra.mxu0 %v1810
      %1846 = vmatmul.bf16.gmra.mxu0 %v1815
      %v1847 = vpop.f32.mrf.mxu0
      %v1848 = vadd.f32 %v1763, %v1847
      %v1849 = vpop.f32.mrf.mxu0
      %v1850 = vadd.f32 %v1765, %v1849
      %1851 = vmatmul.bf16.gmra.mxu0 %v1818
      %v1852 = vpop.f32.mrf.mxu0
      %v1853 = vadd.f32 %v1768, %v1852
      %v1854 = vpop.f32.mrf.mxu0
      %v1855 = vadd.f32 %v1770, %v1854
      %1856 = vmatmul.bf16.gmra.mxu0 %v1821
      %v1857 = vpop.f32.mrf.mxu0
      %v1858 = vadd.f32 %v1773, %v1857
      %v1859 = vpop.f32.mrf.mxu0
      %v1860 = vadd.f32 %v1775, %v1859
      %1861 = vmatmul.bf16.gmra.mxu0 %v1824
      %v1862 = vpop.f32.mrf.mxu0
      %v1863 = vadd.f32 %v1778, %v1862
      %v1864 = vpop.f32.mrf.mxu0
      %v1865 = vadd.f32 %v1780, %v1864
      %1866 = vmatmul.bf16.gmra.mxu0 %v1827
      %v1867 = vpop.f32.mrf.mxu0
      %v1868 = vadd.f32 %v1783, %v1867
      %v1869 = vpop.f32.mrf.mxu0
      %v1870 = vadd.f32 %v1785, %v1869
      %1871 = vmatmul.bf16.gmra.mxu0 %v1830
      %v1872 = vpop.f32.mrf.mxu0
      %v1873 = vadd.f32 %v1788, %v1872
      %v1874 = vpop.f32.mrf.mxu0
      %v1875 = vadd.f32 %v1790, %v1874
      %1876 = vmatmul.bf16.gmra.mxu0 %v1833
      %v1877 = vpop.f32.mrf.mxu0
      %v1878 = vadd.f32 %v1793, %v1877
      %v1879 = vpop.f32.mrf.mxu0
      %v1880 = vadd.f32 %v1795, %v1879
      %1881 = vmatmul.bf16.gmra.mxu0 %v1836
      %v1882 = vpop.f32.mrf.mxu0
      %v1883 = vadd.f32 %v1798, %v1882
      %v1884 = vpop.f32.mrf.mxu0
      %v1885 = vadd.f32 %v1800, %v1884
      %1886 = vdwg.mxu0
      %v1887 = vld [vmem:[%s10] sm:$0x1]
      %v1889 = vperm.slane %v1887, 0
      %v1891 = vadd.f32 %v1848, %v1889
      %v1892 = vadd.f32 %v1850, %v1889
      %v1893 = vadd.f32 %v1853, %v1889
      %v1894 = vadd.f32 %v1855, %v1889
      %v1895 = vadd.f32 %v1858, %v1889
      %v1896 = vadd.f32 %v1860, %v1889
      %v1897 = vadd.f32 %v1863, %v1889
      %v1898 = vadd.f32 %v1865, %v1889
      %v1899 = vadd.f32 %v1868, %v1889
      %v1900 = vadd.f32 %v1870, %v1889
      %v1901 = vadd.f32 %v1873, %v1889
      %v1902 = vadd.f32 %v1875, %v1889
      %v1903 = vadd.f32 %v1878, %v1889
      %v1904 = vadd.f32 %v1880, %v1889
      %v1905 = vadd.f32 %v1883, %v1889
      %v1906 = vadd.f32 %v1885, %v1889
      %vm1907 = vcmp.ge.f32.partialorder %v1891, 0.0
      %vm1908 = vcmp.ge.f32.partialorder %v1892, 0.0
      %vm1909 = vcmp.ge.f32.partialorder %v1893, 0.0
      %vm1910 = vcmp.ge.f32.partialorder %v1894, 0.0
      %vm1911 = vcmp.ge.f32.partialorder %v1895, 0.0
      %vm1912 = vcmp.ge.f32.partialorder %v1896, 0.0
      %vm1913 = vcmp.ge.f32.partialorder %v1897, 0.0
      %vm1914 = vcmp.ge.f32.partialorder %v1898, 0.0
      %vm1915 = vcmp.ge.f32.partialorder %v1899, 0.0
      %vm1916 = vcmp.ge.f32.partialorder %v1900, 0.0
      %vm1917 = vcmp.ge.f32.partialorder %v1901, 0.0
      %vm1918 = vcmp.ge.f32.partialorder %v1902, 0.0
      %vm1919 = vcmp.ge.f32.partialorder %v1903, 0.0
      %vm1920 = vcmp.ge.f32.partialorder %v1904, 0.0
      %vm1921 = vcmp.ge.f32.partialorder %v1905, 0.0
      %vm1922 = vcmp.ge.f32.partialorder %v1906, 0.0
      %v1923 = vmul.f32 %v1891, 0.1
      %v1924 = vmul.f32 %v1892, 0.1
      %v1925 = vmul.f32 %v1893, 0.1
      %v1926 = vmul.f32 %v1894, 0.1
      %v1927 = vmul.f32 %v1895, 0.1
      %v1928 = vmul.f32 %v1896, 0.1
      %v1929 = vmul.f32 %v1897, 0.1
      %v1930 = vmul.f32 %v1898, 0.1
      %v1931 = vmul.f32 %v1899, 0.1
      %v1932 = vmul.f32 %v1900, 0.1
      %v1933 = vmul.f32 %v1901, 0.1
      %v1934 = vmul.f32 %v1902, 0.1
      %v1935 = vmul.f32 %v1903, 0.1
      %v1936 = vmul.f32 %v1904, 0.1
      %v1937 = vmul.f32 %v1905, 0.1
      %v1938 = vmul.f32 %v1906, 0.1
      %v1939 = vsel %vm1907, %v1891, %v1923
      %v1940 = vsel %vm1908, %v1892, %v1924
      %v1941 = vsel %vm1909, %v1893, %v1925
      %v1942 = vsel %vm1910, %v1894, %v1926
      %v1943 = vsel %vm1911, %v1895, %v1927
      %v1944 = vsel %vm1912, %v1896, %v1928
      %v1945 = vsel %vm1913, %v1897, %v1929
      %v1946 = vsel %vm1914, %v1898, %v1930
      %v1947 = vsel %vm1915, %v1899, %v1931
      %v1948 = vsel %vm1916, %v1900, %v1932
      %v1949 = vsel %vm1917, %v1901, %v1933
      %v1950 = vsel %vm1918, %v1902, %v1934
      %v1951 = vsel %vm1919, %v1903, %v1935
      %v1952 = vsel %vm1920, %v1904, %v1936
      %v1953 = vsel %vm1921, %v1905, %v1937
      %v1954 = vsel %vm1922, %v1906, %v1938
      %v1955 = vadd.f32 %v1939, %v1280
      %v1956 = vadd.f32 %v1940, %v1281
      %v1957 = vadd.f32 %v1941, %v1282
      %v1958 = vadd.f32 %v1942, %v1283
      %v1959 = vadd.f32 %v1943, %v1284
      %v1960 = vadd.f32 %v1944, %v1285
      %v1961 = vadd.f32 %v1945, %v1286
      %v1962 = vadd.f32 %v1946, %v1287
      %v1963 = vadd.f32 %v1947, %v1288
      %v1964 = vadd.f32 %v1948, %v1289
      %v1965 = vadd.f32 %v1949, %v1290
      %v1966 = vadd.f32 %v1950, %v1291
      %v1967 = vadd.f32 %v1951, %v1292
      %v1968 = vadd.f32 %v1952, %v1293
      %v1969 = vadd.f32 %v1953, %v1294
      %v1970 = vadd.f32 %v1954, %v1295
      %vm1971 = vcmp.ge.f32.partialorder %v1955, 0.0
      %vm1972 = vcmp.ge.f32.partialorder %v1956, 0.0
      %vm1973 = vcmp.ge.f32.partialorder %v1957, 0.0
      %vm1974 = vcmp.ge.f32.partialorder %v1958, 0.0
      %vm1975 = vcmp.ge.f32.partialorder %v1959, 0.0
      %vm1976 = vcmp.ge.f32.partialorder %v1960, 0.0
      %vm1977 = vcmp.ge.f32.partialorder %v1961, 0.0
      %vm1978 = vcmp.ge.f32.partialorder %v1962, 0.0
      %vm1979 = vcmp.ge.f32.partialorder %v1963, 0.0
      %vm1980 = vcmp.ge.f32.partialorder %v1964, 0.0
      %vm1981 = vcmp.ge.f32.partialorder %v1965, 0.0
      %vm1982 = vcmp.ge.f32.partialorder %v1966, 0.0
      %vm1983 = vcmp.ge.f32.partialorder %v1967, 0.0
      %vm1984 = vcmp.ge.f32.partialorder %v1968, 0.0
      %vm1985 = vcmp.ge.f32.partialorder %v1969, 0.0
      %vm1986 = vcmp.ge.f32.partialorder %v1970, 0.0
      %v1987 = vmul.f32 %v1955, 0.1
      %v1988 = vmul.f32 %v1956, 0.1
      %v1989 = vmul.f32 %v1957, 0.1
      %v1990 = vmul.f32 %v1958, 0.1
      %v1991 = vmul.f32 %v1959, 0.1
      %v1992 = vmul.f32 %v1960, 0.1
      %v1993 = vmul.f32 %v1961, 0.1
      %v1994 = vmul.f32 %v1962, 0.1
      %v1995 = vmul.f32 %v1963, 0.1
      %v1996 = vmul.f32 %v1964, 0.1
      %v1997 = vmul.f32 %v1965, 0.1
      %v1998 = vmul.f32 %v1966, 0.1
      %v1999 = vmul.f32 %v1967, 0.1
      %v2000 = vmul.f32 %v1968, 0.1
      %v2001 = vmul.f32 %v1969, 0.1
      %v2002 = vmul.f32 %v1970, 0.1
      %v2003 = vsel %vm1971, %v1955, %v1987
      %v2004 = vsel %vm1972, %v1956, %v1988
      %v2005 = vsel %vm1973, %v1957, %v1989
      %v2006 = vsel %vm1974, %v1958, %v1990
      %v2007 = vsel %vm1975, %v1959, %v1991
      %v2008 = vsel %vm1976, %v1960, %v1992
      %v2009 = vsel %vm1977, %v1961, %v1993
      %v2010 = vsel %vm1978, %v1962, %v1994
      %v2011 = vsel %vm1979, %v1963, %v1995
      %v2012 = vsel %vm1980, %v1964, %v1996
      %v2013 = vsel %vm1981, %v1965, %v1997
      %v2014 = vsel %vm1982, %v1966, %v1998
      %v2015 = vsel %vm1983, %v1967, %v1999
      %v2016 = vsel %vm1984, %v1968, %v2000
      %v2017 = vsel %vm1985, %v1969, %v2001
      %v2018 = vsel %vm1986, %v1970, %v2002
      %v2019 = vpack.c.bf16 %v2004, %v2003
      %v2020 = vpack.c.bf16 %v2006, %v2005
      %v2021 = vpack.c.bf16 %v2008, %v2007
      %v2022 = vpack.c.bf16 %v2010, %v2009
      %v2023 = vpack.c.bf16 %v2012, %v2011
      %v2024 = vpack.c.bf16 %v2014, %v2013
      %v2025 = vpack.c.bf16 %v2016, %v2015
      %v2026 = vpack.c.bf16 %v2018, %v2017
      %v2027 = vld [vmem:[%s11] sm:$0xf]
      %v2028 = vld [vmem:[%s11 + $0x4] sm:$0xf]
      %v2029 = vld [vmem:[%s11 + $0x8] sm:$0xf]
      %v2030 = vld [vmem:[%s11 + $0xc] sm:$0xf]
      %v2031 = vld [vmem:[#allocation5] sm:$0x1]
      %v2033 = vperm.slane %v2031, 0
      %v2039 = vunpack.c.l.b16 %v2027
      %v2040 = vunpack.c.l.b16 %v2028
      %v2041 = vunpack.c.l.b16 %v2029
      %v2042 = vunpack.c.l.b16 %v2030
      %v2043 = vpack.c.b16 %v2040, %v2039
      %v2044 = vpack.c.b16 %v2042, %v2041
      %v2048 = vsel %vm826, %v2019, 0
      %v2051 = vsel %vm826, %v2020, 0
      %v2054 = vsel %vm826, %v2021, 0
      %v2057 = vsel %vm826, %v2022, 0
      %v2060 = vsel %vm826, %v2023, 0
      %v2063 = vsel %vm826, %v2024, 0
      %v2066 = vsel %vm826, %v2025, 0
      %v2069 = vsel %vm826, %v2026, 0
      %2071 = vmatpush.bf16.msra.mxu0 0
      %2072 = vmatpush.bf16.msra.mxu0 0
      %2073 = vmatpush.bf16.msra.mxu0 0
      %2074 = vmatpush.bf16.msra.mxu0 0
      %2075 = vmatpush.bf16.msra.mxu0 0
      %2076 = vmatpush.bf16.msra.mxu0 0
      %2077 = vmatpush.bf16.msra.mxu0 %v2044
      %2078 = vmatpush.bf16.msra.mxu0 %v2043
      %2079 = vmatmul.bf16.gmra.mxu0 %v2048
      %v2080 = vpop.f32.mrf.mxu0
      %v2081 = vadd.f32 %v2033, %v2080
      %v2082 = vpop.f32.mrf.mxu0
      %v2083 = vadd.f32 %v2033, %v2082
      %2084 = vmatmul.bf16.gmra.mxu0 %v2051
      %v2085 = vpop.f32.mrf.mxu0
      %v2086 = vadd.f32 %v2033, %v2085
      %v2087 = vpop.f32.mrf.mxu0
      %v2088 = vadd.f32 %v2033, %v2087
      %2089 = vmatmul.bf16.gmra.mxu0 %v2054
      %v2090 = vpop.f32.mrf.mxu0
      %v2091 = vadd.f32 %v2033, %v2090
      %v2092 = vpop.f32.mrf.mxu0
      %v2093 = vadd.f32 %v2033, %v2092
      %2094 = vmatmul.bf16.gmra.mxu0 %v2057
      %v2095 = vpop.f32.mrf.mxu0
      %v2096 = vadd.f32 %v2033, %v2095
      %v2097 = vpop.f32.mrf.mxu0
      %v2098 = vadd.f32 %v2033, %v2097
      %2099 = vmatmul.bf16.gmra.mxu0 %v2060
      %v2100 = vpop.f32.mrf.mxu0
      %v2101 = vadd.f32 %v2033, %v2100
      %v2102 = vpop.f32.mrf.mxu0
      %v2103 = vadd.f32 %v2033, %v2102
      %2104 = vmatmul.bf16.gmra.mxu0 %v2063
      %v2105 = vpop.f32.mrf.mxu0
      %v2106 = vadd.f32 %v2033, %v2105
      %v2107 = vpop.f32.mrf.mxu0
      %v2108 = vadd.f32 %v2033, %v2107
      %2109 = vmatmul.bf16.gmra.mxu0 %v2066
      %v2110 = vpop.f32.mrf.mxu0
      %v2111 = vadd.f32 %v2033, %v2110
      %v2112 = vpop.f32.mrf.mxu0
      %v2113 = vadd.f32 %v2033, %v2112
      %2114 = vmatmul.bf16.gmra.mxu0 %v2069
      %v2115 = vpop.f32.mrf.mxu0
      %v2116 = vadd.f32 %v2033, %v2115
      %v2117 = vpop.f32.mrf.mxu0
      %v2118 = vadd.f32 %v2033, %v2117
      %2119 = vdwg.mxu0
      %v2120 = vxor.u32 %v2081, 2147483648
      %v2121 = vxor.u32 %v2083, 2147483648
      %v2122 = vxor.u32 %v2086, 2147483648
      %v2123 = vxor.u32 %v2088, 2147483648
      %v2124 = vxor.u32 %v2091, 2147483648
      %v2125 = vxor.u32 %v2093, 2147483648
      %v2126 = vxor.u32 %v2096, 2147483648
      %v2127 = vxor.u32 %v2098, 2147483648
      %v2128 = vxor.u32 %v2101, 2147483648
      %v2129 = vxor.u32 %v2103, 2147483648
      %v2130 = vxor.u32 %v2106, 2147483648
      %v2131 = vxor.u32 %v2108, 2147483648
      %v2132 = vxor.u32 %v2111, 2147483648
      %v2133 = vxor.u32 %v2113, 2147483648
      %v2134 = vxor.u32 %v2116, 2147483648
      %v2135 = vxor.u32 %v2118, 2147483648
      %v2136 = vmul.f32 %v2120, 1.442695
      %v2137 = vpow.pop %v2136
      %v2138 = vmul.f32 %v2121, 1.442695
      %v2139 = vpow.pop %v2138
      %v2140 = vmul.f32 %v2122, 1.442695
      %v2141 = vpow.pop %v2140
      %v2142 = vmul.f32 %v2123, 1.442695
      %v2143 = vpow.pop %v2142
      %v2144 = vmul.f32 %v2124, 1.442695
      %v2145 = vpow.pop %v2144
      %v2146 = vmul.f32 %v2125, 1.442695
      %v2147 = vpow.pop %v2146
      %v2148 = vmul.f32 %v2126, 1.442695
      %v2149 = vpow.pop %v2148
      %v2150 = vmul.f32 %v2127, 1.442695
      %v2151 = vpow.pop %v2150
      %v2152 = vmul.f32 %v2128, 1.442695
      %v2153 = vpow.pop %v2152
      %v2154 = vmul.f32 %v2129, 1.442695
      %v2155 = vpow.pop %v2154
      %v2156 = vmul.f32 %v2130, 1.442695
      %v2157 = vpow.pop %v2156
      %v2158 = vmul.f32 %v2131, 1.442695
      %v2159 = vpow.pop %v2158
      %v2160 = vmul.f32 %v2132, 1.442695
      %v2161 = vpow.pop %v2160
      %v2162 = vmul.f32 %v2133, 1.442695
      %v2163 = vpow.pop %v2162
      %v2164 = vmul.f32 %v2134, 1.442695
      %v2165 = vpow.pop %v2164
      %v2166 = vmul.f32 %v2135, 1.442695
      %v2167 = vpow.pop %v2166
      %v2168 = vadd.f32 %v2137, 1.0
      %v2169 = vadd.f32 %v2139, 1.0
      %v2170 = vadd.f32 %v2141, 1.0
      %v2171 = vadd.f32 %v2143, 1.0
      %v2172 = vadd.f32 %v2145, 1.0
      %v2173 = vadd.f32 %v2147, 1.0
      %v2174 = vadd.f32 %v2149, 1.0
      %v2175 = vadd.f32 %v2151, 1.0
      %v2176 = vadd.f32 %v2153, 1.0
      %v2177 = vadd.f32 %v2155, 1.0
      %v2178 = vadd.f32 %v2157, 1.0
      %v2179 = vadd.f32 %v2159, 1.0
      %v2180 = vadd.f32 %v2161, 1.0
      %v2181 = vadd.f32 %v2163, 1.0
      %v2182 = vadd.f32 %v2165, 1.0
      %v2183 = vadd.f32 %v2167, 1.0
      %v2184 = vrcp.pop %v2168
      %v2185 = vmul.f32 %v2168, %v2184
      %v2186 = vsub.f32 1.0, %v2185
      %v2187 = vmul.f32 %v2184, %v2186
      %v2188 = vadd.f32 %v2184, %v2187
      %vm2189 = vweird.f32 %v2168
      %vm2190 = vweird.f32 %v2184
      %vm2191 = vmor %vm2189, %vm2190
      %v2192 = vsel %vm2191, %v2184, %v2188
      %v2193 = vand.u32 2147483647, %v2168
      %vm2194 = vcmp.eq.f32.partialorder %v2193, 8.507059e+37
      %v2195 = vand.u32 %v2168, 2147483648
      %v2196 = vor.u32 1.1754944e-38, %v2195
      %v2197 = vsel %vm2194, %v2196, %v2192
      %v2198 = vmul.f32 1.0, %v2197
      %v2199 = vrcp.pop %v2169
      %v2200 = vmul.f32 %v2169, %v2199
      %v2201 = vsub.f32 1.0, %v2200
      %v2202 = vmul.f32 %v2199, %v2201
      %v2203 = vadd.f32 %v2199, %v2202
      %vm2204 = vweird.f32 %v2169
      %vm2205 = vweird.f32 %v2199
      %vm2206 = vmor %vm2204, %vm2205
      %v2207 = vsel %vm2206, %v2199, %v2203
      %v2208 = vand.u32 2147483647, %v2169
      %vm2209 = vcmp.eq.f32.partialorder %v2208, 8.507059e+37
      %v2210 = vand.u32 %v2169, 2147483648
      %v2211 = vor.u32 1.1754944e-38, %v2210
      %v2212 = vsel %vm2209, %v2211, %v2207
      %v2213 = vmul.f32 1.0, %v2212
      %v2214 = vrcp.pop %v2170
      %v2215 = vmul.f32 %v2170, %v2214
      %v2216 = vsub.f32 1.0, %v2215
      %v2217 = vmul.f32 %v2214, %v2216
      %v2218 = vadd.f32 %v2214, %v2217
      %vm2219 = vweird.f32 %v2170
      %vm2220 = vweird.f32 %v2214
      %vm2221 = vmor %vm2219, %vm2220
      %v2222 = vsel %vm2221, %v2214, %v2218
      %v2223 = vand.u32 2147483647, %v2170
      %vm2224 = vcmp.eq.f32.partialorder %v2223, 8.507059e+37
      %v2225 = vand.u32 %v2170, 2147483648
      %v2226 = vor.u32 1.1754944e-38, %v2225
      %v2227 = vsel %vm2224, %v2226, %v2222
      %v2228 = vmul.f32 1.0, %v2227
      %v2229 = vrcp.pop %v2171
      %v2230 = vmul.f32 %v2171, %v2229
      %v2231 = vsub.f32 1.0, %v2230
      %v2232 = vmul.f32 %v2229, %v2231
      %v2233 = vadd.f32 %v2229, %v2232
      %vm2234 = vweird.f32 %v2171
      %vm2235 = vweird.f32 %v2229
      %vm2236 = vmor %vm2234, %vm2235
      %v2237 = vsel %vm2236, %v2229, %v2233
      %v2238 = vand.u32 2147483647, %v2171
      %vm2239 = vcmp.eq.f32.partialorder %v2238, 8.507059e+37
      %v2240 = vand.u32 %v2171, 2147483648
      %v2241 = vor.u32 1.1754944e-38, %v2240
      %v2242 = vsel %vm2239, %v2241, %v2237
      %v2243 = vmul.f32 1.0, %v2242
      %v2244 = vrcp.pop %v2172
      %v2245 = vmul.f32 %v2172, %v2244
      %v2246 = vsub.f32 1.0, %v2245
      %v2247 = vmul.f32 %v2244, %v2246
      %v2248 = vadd.f32 %v2244, %v2247
      %vm2249 = vweird.f32 %v2172
      %vm2250 = vweird.f32 %v2244
      %vm2251 = vmor %vm2249, %vm2250
      %v2252 = vsel %vm2251, %v2244, %v2248
      %v2253 = vand.u32 2147483647, %v2172
      %vm2254 = vcmp.eq.f32.partialorder %v2253, 8.507059e+37
      %v2255 = vand.u32 %v2172, 2147483648
      %v2256 = vor.u32 1.1754944e-38, %v2255
      %v2257 = vsel %vm2254, %v2256, %v2252
      %v2258 = vmul.f32 1.0, %v2257
      %v2259 = vrcp.pop %v2173
      %v2260 = vmul.f32 %v2173, %v2259
      %v2261 = vsub.f32 1.0, %v2260
      %v2262 = vmul.f32 %v2259, %v2261
      %v2263 = vadd.f32 %v2259, %v2262
      %vm2264 = vweird.f32 %v2173
      %vm2265 = vweird.f32 %v2259
      %vm2266 = vmor %vm2264, %vm2265
      %v2267 = vsel %vm2266, %v2259, %v2263
      %v2268 = vand.u32 2147483647, %v2173
      %vm2269 = vcmp.eq.f32.partialorder %v2268, 8.507059e+37
      %v2270 = vand.u32 %v2173, 2147483648
      %v2271 = vor.u32 1.1754944e-38, %v2270
      %v2272 = vsel %vm2269, %v2271, %v2267
      %v2273 = vmul.f32 1.0, %v2272
      %v2274 = vrcp.pop %v2174
      %v2275 = vmul.f32 %v2174, %v2274
      %v2276 = vsub.f32 1.0, %v2275
      %v2277 = vmul.f32 %v2274, %v2276
      %v2278 = vadd.f32 %v2274, %v2277
      %vm2279 = vweird.f32 %v2174
      %vm2280 = vweird.f32 %v2274
      %vm2281 = vmor %vm2279, %vm2280
      %v2282 = vsel %vm2281, %v2274, %v2278
      %v2283 = vand.u32 2147483647, %v2174
      %vm2284 = vcmp.eq.f32.partialorder %v2283, 8.507059e+37
      %v2285 = vand.u32 %v2174, 2147483648
      %v2286 = vor.u32 1.1754944e-38, %v2285
      %v2287 = vsel %vm2284, %v2286, %v2282
      %v2288 = vmul.f32 1.0, %v2287
      %v2289 = vrcp.pop %v2175
      %v2290 = vmul.f32 %v2175, %v2289
      %v2291 = vsub.f32 1.0, %v2290
      %v2292 = vmul.f32 %v2289, %v2291
      %v2293 = vadd.f32 %v2289, %v2292
      %vm2294 = vweird.f32 %v2175
      %vm2295 = vweird.f32 %v2289
      %vm2296 = vmor %vm2294, %vm2295
      %v2297 = vsel %vm2296, %v2289, %v2293
      %v2298 = vand.u32 2147483647, %v2175
      %vm2299 = vcmp.eq.f32.partialorder %v2298, 8.507059e+37
      %v2300 = vand.u32 %v2175, 2147483648
      %v2301 = vor.u32 1.1754944e-38, %v2300
      %v2302 = vsel %vm2299, %v2301, %v2297
      %v2303 = vmul.f32 1.0, %v2302
      %v2304 = vrcp.pop %v2176
      %v2305 = vmul.f32 %v2176, %v2304
      %v2306 = vsub.f32 1.0, %v2305
      %v2307 = vmul.f32 %v2304, %v2306
      %v2308 = vadd.f32 %v2304, %v2307
      %vm2309 = vweird.f32 %v2176
      %vm2310 = vweird.f32 %v2304
      %vm2311 = vmor %vm2309, %vm2310
      %v2312 = vsel %vm2311, %v2304, %v2308
      %v2313 = vand.u32 2147483647, %v2176
      %vm2314 = vcmp.eq.f32.partialorder %v2313, 8.507059e+37
      %v2315 = vand.u32 %v2176, 2147483648
      %v2316 = vor.u32 1.1754944e-38, %v2315
      %v2317 = vsel %vm2314, %v2316, %v2312
      %v2318 = vmul.f32 1.0, %v2317
      %v2319 = vrcp.pop %v2177
      %v2320 = vmul.f32 %v2177, %v2319
      %v2321 = vsub.f32 1.0, %v2320
      %v2322 = vmul.f32 %v2319, %v2321
      %v2323 = vadd.f32 %v2319, %v2322
      %vm2324 = vweird.f32 %v2177
      %vm2325 = vweird.f32 %v2319
      %vm2326 = vmor %vm2324, %vm2325
      %v2327 = vsel %vm2326, %v2319, %v2323
      %v2328 = vand.u32 2147483647, %v2177
      %vm2329 = vcmp.eq.f32.partialorder %v2328, 8.507059e+37
      %v2330 = vand.u32 %v2177, 2147483648
      %v2331 = vor.u32 1.1754944e-38, %v2330
      %v2332 = vsel %vm2329, %v2331, %v2327
      %v2333 = vmul.f32 1.0, %v2332
      %v2334 = vrcp.pop %v2178
      %v2335 = vmul.f32 %v2178, %v2334
      %v2336 = vsub.f32 1.0, %v2335
      %v2337 = vmul.f32 %v2334, %v2336
      %v2338 = vadd.f32 %v2334, %v2337
      %vm2339 = vweird.f32 %v2178
      %vm2340 = vweird.f32 %v2334
      %vm2341 = vmor %vm2339, %vm2340
      %v2342 = vsel %vm2341, %v2334, %v2338
      %v2343 = vand.u32 2147483647, %v2178
      %vm2344 = vcmp.eq.f32.partialorder %v2343, 8.507059e+37
      %v2345 = vand.u32 %v2178, 2147483648
      %v2346 = vor.u32 1.1754944e-38, %v2345
      %v2347 = vsel %vm2344, %v2346, %v2342
      %v2348 = vmul.f32 1.0, %v2347
      %v2349 = vrcp.pop %v2179
      %v2350 = vmul.f32 %v2179, %v2349
      %v2351 = vsub.f32 1.0, %v2350
      %v2352 = vmul.f32 %v2349, %v2351
      %v2353 = vadd.f32 %v2349, %v2352
      %vm2354 = vweird.f32 %v2179
      %vm2355 = vweird.f32 %v2349
      %vm2356 = vmor %vm2354, %vm2355
      %v2357 = vsel %vm2356, %v2349, %v2353
      %v2358 = vand.u32 2147483647, %v2179
      %vm2359 = vcmp.eq.f32.partialorder %v2358, 8.507059e+37
      %v2360 = vand.u32 %v2179, 2147483648
      %v2361 = vor.u32 1.1754944e-38, %v2360
      %v2362 = vsel %vm2359, %v2361, %v2357
      %v2363 = vmul.f32 1.0, %v2362
      %v2364 = vrcp.pop %v2180
      %v2365 = vmul.f32 %v2180, %v2364
      %v2366 = vsub.f32 1.0, %v2365
      %v2367 = vmul.f32 %v2364, %v2366
      %v2368 = vadd.f32 %v2364, %v2367
      %vm2369 = vweird.f32 %v2180
      %vm2370 = vweird.f32 %v2364
      %vm2371 = vmor %vm2369, %vm2370
      %v2372 = vsel %vm2371, %v2364, %v2368
      %v2373 = vand.u32 2147483647, %v2180
      %vm2374 = vcmp.eq.f32.partialorder %v2373, 8.507059e+37
      %v2375 = vand.u32 %v2180, 2147483648
      %v2376 = vor.u32 1.1754944e-38, %v2375
      %v2377 = vsel %vm2374, %v2376, %v2372
      %v2378 = vmul.f32 1.0, %v2377
      %v2379 = vrcp.pop %v2181
      %v2380 = vmul.f32 %v2181, %v2379
      %v2381 = vsub.f32 1.0, %v2380
      %v2382 = vmul.f32 %v2379, %v2381
      %v2383 = vadd.f32 %v2379, %v2382
      %vm2384 = vweird.f32 %v2181
      %vm2385 = vweird.f32 %v2379
      %vm2386 = vmor %vm2384, %vm2385
      %v2387 = vsel %vm2386, %v2379, %v2383
      %v2388 = vand.u32 2147483647, %v2181
      %vm2389 = vcmp.eq.f32.partialorder %v2388, 8.507059e+37
      %v2390 = vand.u32 %v2181, 2147483648
      %v2391 = vor.u32 1.1754944e-38, %v2390
      %v2392 = vsel %vm2389, %v2391, %v2387
      %v2393 = vmul.f32 1.0, %v2392
      %v2394 = vrcp.pop %v2182
      %v2395 = vmul.f32 %v2182, %v2394
      %v2396 = vsub.f32 1.0, %v2395
      %v2397 = vmul.f32 %v2394, %v2396
      %v2398 = vadd.f32 %v2394, %v2397
      %vm2399 = vweird.f32 %v2182
      %vm2400 = vweird.f32 %v2394
      %vm2401 = vmor %vm2399, %vm2400
      %v2402 = vsel %vm2401, %v2394, %v2398
      %v2403 = vand.u32 2147483647, %v2182
      %vm2404 = vcmp.eq.f32.partialorder %v2403, 8.507059e+37
      %v2405 = vand.u32 %v2182, 2147483648
      %v2406 = vor.u32 1.1754944e-38, %v2405
      %v2407 = vsel %vm2404, %v2406, %v2402
      %v2408 = vmul.f32 1.0, %v2407
      %v2409 = vrcp.pop %v2183
      %v2410 = vmul.f32 %v2183, %v2409
      %v2411 = vsub.f32 1.0, %v2410
      %v2412 = vmul.f32 %v2409, %v2411
      %v2413 = vadd.f32 %v2409, %v2412
      %vm2414 = vweird.f32 %v2183
      %vm2415 = vweird.f32 %v2409
      %vm2416 = vmor %vm2414, %vm2415
      %v2417 = vsel %vm2416, %v2409, %v2413
      %v2418 = vand.u32 2147483647, %v2183
      %vm2419 = vcmp.eq.f32.partialorder %v2418, 8.507059e+37
      %v2420 = vand.u32 %v2183, 2147483648
      %v2421 = vor.u32 1.1754944e-38, %v2420
      %v2422 = vsel %vm2419, %v2421, %v2417
      %v2423 = vmul.f32 1.0, %v2422
      %vm2424 = vcmask 7168
      %2425 = vst.msk [vmem:[%s480] sm:$0xff] %vm2424, %v2198
      %2426 = vst.msk [vmem:[%s480 + $0x8] sm:$0xff] %vm2424, %v2213
      %2427 = vst.msk [vmem:[%s480 + $0x10] sm:$0xff] %vm2424, %v2228
      %2428 = vst.msk [vmem:[%s480 + $0x18] sm:$0xff] %vm2424, %v2243
      %2429 = vst.msk [vmem:[%s480 + $0x20] sm:$0xff] %vm2424, %v2258
      %2430 = vst.msk [vmem:[%s480 + $0x28] sm:$0xff] %vm2424, %v2273
      %2431 = vst.msk [vmem:[%s480 + $0x30] sm:$0xff] %vm2424, %v2288
      %2432 = vst.msk [vmem:[%s480 + $0x38] sm:$0xff] %vm2424, %v2303
      %2433 = vst.msk [vmem:[%s480 + $0x40] sm:$0xff] %vm2424, %v2318
      %2434 = vst.msk [vmem:[%s480 + $0x48] sm:$0xff] %vm2424, %v2333
      %2435 = vst.msk [vmem:[%s480 + $0x50] sm:$0xff] %vm2424, %v2348
      %2436 = vst.msk [vmem:[%s480 + $0x58] sm:$0xff] %vm2424, %v2363
      %2437 = vst.msk [vmem:[%s480 + $0x60] sm:$0xff] %vm2424, %v2378
      %2438 = vst.msk [vmem:[%s480 + $0x68] sm:$0xff] %vm2424, %v2393
      %2439 = vst.msk [vmem:[%s480 + $0x70] sm:$0xff] %vm2424, %v2408
      %2440 = vst.msk [vmem:[%s480 + $0x78] sm:$0xff] %vm2424, %v2423
      %s2441 = smul.u32 16, %s31
      %p2442 = scmp.lt.s32.totalorder %s30, 1
      %s2443 = scalar_select %p2442, %s30, 1
      %p2444 = scmp.lt.s32.totalorder %s2441, 15
      %s2445 = scalar_select %p2444, %s2441, 15
      %s2446 = smul.addr %s2443, 16
      %s2447 = sadd.s32 %s2445, %s2446
      %s2448 = smul.addr %s2447, 8
      %s2449 = scalar_lea.vmem %s13, %s2448
      // Predicated region
      $region97: #{tpu_custom_call.1} parent=71 // pred_check
        %p2450 = pneg %p338
      $region98: #{tpu_custom_call.1} parent=71 // pred_check_branch
        %2452 = sbr.rel (%p2450) target = $region100
      $region99: #{tpu_custom_call.1} parent=71 // pred_region
        %s2453 = smul.u32 16, %s31
      $region100: #{tpu_custom_call.1} parent=71 // pred_fallthru
        _
    $region72: #{tpu_custom_call.1} parent=5 // pred_fallthru
      _
    %p2454 = scmp.le.s32.totalorder 2, %s21
    // Predicated region
    $region101: #{tpu_custom_call.1} parent=5 // pred_check
      %p2455 = pneg %p2454
    $region102: #{tpu_custom_call.1} parent=5 // pred_check_branch
      %2457 = sbr.rel (%p2455) target = $region104
    $region103: #{tpu_custom_call.1} parent=5 // pred_region
      %s2458 = ssub.s32 %s21, 2
      // Predicated region
      $region105: #{tpu_custom_call.1} parent=103 // pred_check
        %p2459 = pneg %p344
      $region106: #{tpu_custom_call.1} parent=103 // pred_check_branch
        %2461 = sbr.rel (%p2459) target = $region108
      $region107: #{tpu_custom_call.1} parent=103 // pred_region
        %s2462 = smul.u32 16, %s33
        %p2463 = scmp.lt.s32.totalorder %s32, 1
        %s2464 = scalar_select %p2463, %s32, 1
        %p2465 = scmp.lt.s32.totalorder %s2462, 15
        %s2466 = scalar_select %p2465, %s2462, 15
        %s2467 = smul.addr %s2464, 16
        %s2468 = sadd.s32 %s2466, %s2467
        %s2469 = smul.addr %s2468, 8
        %s2470 = scalar_lea.vmem %s13, %s2469
      $region108: #{tpu_custom_call.1} parent=103 // pred_fallthru
        _
    $region104: #{tpu_custom_call.1} parent=5 // pred_fallthru
      _
  $region6: #{tpu_custom_call.1} parent=0 // loop_footer
    %s25 = sadd.s32 1, %s21
  $region7: #{tpu_custom_call.1} parent=0 // loop_footer_branch
    %20 = sbr.rel target = $region3
  $region8: #{tpu_custom_call.1} parent=0 // loop_exit
    _

</llo_original>
